<compile_context>
chip_gen: v5e
topology: v5e:2x2
jax: 0.10.0
libtpu: 0.0.40
codegen_flags: <defaults>
</compile_context>

<pallas_src>
import functools

import jax
import jax.numpy as jnp
from jax import lax
from jax.experimental import pallas as pl
from jax.experimental.pallas import tpu as pltpu

_HIGHEST = lax.Precision.HIGHEST


def _pollution_lstm_kernel(x_ref, wih_ref, bias_ref, whh_ref, fcw_ref, fcb_ref,
                           out_ref, *, hidden_size, seq_len, batch,
                           n_predictions):
    """Fused LSTM forward: input projection + recurrence + final FC.

    x_ref    : (T*B, I)  time-major flattened input (row t*B + b == x[b, t, :])
    wih_ref  : (I, 4H)   input->gates weights  (weight_ih_l0 transposed)
    bias_ref : (1, 4H)   b_ih + b_hh
    whh_ref  : (H, 4H)   hidden->gates weights (weight_hh_l0 transposed)
    fcw_ref  : (P, H)    fc weight (PyTorch layout)
    fcb_ref  : (1, P)    fc bias
    out_ref  : (B, P)    output
    """
    H, T, B = hidden_size, seq_len, batch

    # Pre-scale the sigmoid quarters (i, f, o) by 0.5 so the recurrence needs a
    # single tanh per step:  sigmoid(a) == 0.5 * tanh(a / 2) + 0.5.
    # Scaling by 0.5 is exact in f32, so this is numerically equivalent.
    pre = jnp.concatenate(
        [jnp.full((1, 2 * H), 0.5, jnp.float32),   # i, f -> halved (sigmoid)
         jnp.ones((1, H), jnp.float32),            # g    -> untouched (tanh)
         jnp.full((1, H), 0.5, jnp.float32)],      # o    -> halved (sigmoid)
        axis=-1)                                                     # (1, 4H)

    # ---- Off the serial chain: fused input projection (one MXU matmul). ----
    xw = (jnp.dot(x_ref[...], wih_ref[...],
                  preferred_element_type=jnp.float32,
                  precision=_HIGHEST) + bias_ref[...]) * pre        # (T*B, 4H)
    whh = whh_ref[...] * pre                                        # (H, 4H)

    # NOTE: pltpu.matmul_push_rhs / matmul_acc_lhs / matmul_pop (keeping whh
    # resident in the MXU across the T serial steps) intentionally not used at
    # these shapes; see header comment.

    h = jnp.zeros((B, H), jnp.float32)
    c = jnp.zeros((B, H), jnp.float32)

    # T is small and static: a static unroll keeps h/c in vregs (no per-step
    # VMEM round trip), lets the scheduler overlap MXU/VPU/EUP work across
    # steps, and makes every xw row-slab start a compile-time constant.
    for t in range(T):
        # Only the h-dependent matmul sits on the serial critical path.
        gates = xw[t * B:(t + 1) * B, :] + jnp.dot(
            h, whh, preferred_element_type=jnp.float32, precision=_HIGHEST)
        th = jnp.tanh(gates)                     # ONE EUP push for all 4 gates
        i_g = 0.5 * th[:, 0 * H:1 * H] + 0.5     # sigmoid(i) via tanh identity
        f_g = 0.5 * th[:, 1 * H:2 * H] + 0.5     # sigmoid(f)
        g_g = th[:, 2 * H:3 * H]                 # tanh(g)
        o_g = 0.5 * th[:, 3 * H:4 * H] + 0.5     # sigmoid(o)
        c = f_g * c + i_g * g_g
        h = o_g * jnp.tanh(c)

    # ---- Final FC on the last hidden state. ----
    if n_predictions == 1:
        # (B,H)@(H,1) would waste an MXU push and end in a masked store; a VPU
        # multiply + lane reduction is cheaper for P == 1.
        out = jnp.sum(h * fcw_ref[...], axis=-1, keepdims=True) + fcb_ref[...]
    else:
        out = lax.dot_general(h, fcw_ref[...], (((1,), (1,)), ((), ())),
                              preferred_element_type=jnp.float32,
                              precision=_HIGHEST) + fcb_ref[...]
    out_ref[...] = out.astype(out_ref.dtype)


def pollution_lstm_forward(x, params, *, hidden_size, n_predictions):
    """x: (B, T, I) batch-first, like the PyTorch module.  Returns (B, P)."""
    B, T, I = x.shape
    H, P = hidden_size, n_predictions

    # Layout plumbing only (no compute hoisted out of the kernel): present x
    # time-major and flattened so the kernel does ONE (T*B, I)@(I, 4H) input
    # projection and takes static per-step row slabs.  This is B*T*I floats.
    x_tm = jnp.transpose(x.astype(jnp.float32), (1, 0, 2)).reshape(T * B, I)

    wih_t = params["weight_ih"].T                                   # (I, 4H)
    whh_t = params["weight_hh"].T                                   # (H, 4H)
    bias = (params["bias_ih"] + params["bias_hh"]).reshape(1, 4 * H)
    fcw = params["fc_weight"]                                       # (P, H)
    fcb = params["fc_bias"].reshape(1, P)

    vmem = pl.BlockSpec(memory_space=pltpu.MemorySpace.VMEM)
    kernel = functools.partial(
        _pollution_lstm_kernel,
        hidden_size=H, seq_len=T, batch=B, n_predictions=P)

    # Grid-less single invocation: all operands (a few KiB) sit in VMEM.
    # Scaling notes: for large B on v7x add a batch-tile grid axis with
    # dimension_semantics=("parallel",) to use both TensorCores; for large T
    # stream x with a time-axis BlockSpec sized for 2 pipeline buffers within
    # the scoped VMEM limit (re-derive for v7x's 64 MiB VMEM).
    return pl.pallas_call(
        kernel,
        out_shape=jax.ShapeDtypeStruct((B, P), jnp.float32),
        in_specs=[vmem] * 6,
        out_specs=vmem,
    )(x_tm, wih_t, bias, whh_t, fcw, fcb)


def init_params(key, input_size, hidden_size, n_predictions):
    """Deterministic init mirroring PyTorch shapes (uniform(-1/sqrt(H), 1/sqrt(H)))."""
    H = hidden_size
    k = 1.0 / jnp.sqrt(jnp.float32(H))
    keys = jax.random.split(key, 6)
    return {
        "weight_ih": jax.random.uniform(keys[0], (4 * H, input_size), jnp.float32, -k, k),
        "weight_hh": jax.random.uniform(keys[1], (4 * H, H), jnp.float32, -k, k),
        "bias_ih": jax.random.uniform(keys[2], (4 * H,), jnp.float32, -k, k),
        "bias_hh": jax.random.uniform(keys[3], (4 * H,), jnp.float32, -k, k),
        "fc_weight": jax.random.uniform(keys[4], (n_predictions, H), jnp.float32, -k, k),
        "fc_bias": jax.random.uniform(keys[5], (n_predictions,), jnp.float32, -k, k),
    }


def _reference_forward(x, params, hidden_size, n_predictions):
    """Pure-JAX reference of the PyTorch forward (matmul precision pinned)."""
    B, T, I = x.shape
    H = hidden_size
    wih, whh = params["weight_ih"], params["weight_hh"]
    b = params["bias_ih"] + params["bias_hh"]
    h = jnp.zeros((B, H), jnp.float32)
    c = jnp.zeros((B, H), jnp.float32)
    for t in range(T):
        gates = (jnp.dot(x[:, t, :], wih.T, precision=_HIGHEST)
                 + jnp.dot(h, whh.T, precision=_HIGHEST) + b)
        i_g = jax.nn.sigmoid(gates[:, 0 * H:1 * H])
        f_g = jax.nn.sigmoid(gates[:, 1 * H:2 * H])
        g_g = jnp.tanh(gates[:, 2 * H:3 * H])
        o_g = jax.nn.sigmoid(gates[:, 3 * H:4 * H])
        c = f_g * c + i_g * g_g
        h = o_g * jnp.tanh(c)
    return jnp.dot(h, params["fc_weight"].T, precision=_HIGHEST) + params["fc_bias"]


if __name__ == "__main__":
    # Small shapes consistent with the module's forward: (B, T, input_size)
    B, T, INPUT_SIZE, HIDDEN_SIZE, N_PRED = 2, 8, 4, 32, 1

    key = jax.random.PRNGKey(0)
    k_x, k_p = jax.random.split(key)
    x = jax.random.normal(k_x, (B, T, INPUT_SIZE), dtype=jnp.float32)
    params = init_params(k_p, INPUT_SIZE, HIDDEN_SIZE, N_PRED)

    out = pollution_lstm_forward(
        x, params, hidden_size=HIDDEN_SIZE, n_predictions=N_PRED
    )
    out = jax.block_until_ready(out)

    ref = _reference_forward(x, params, HIDDEN_SIZE, N_PRED)
    assert out.shape == (B, N_PRED)
    # Matmuls are pinned to HIGHEST on both sides; the tolerance only has to
    # absorb ~1-2 ulp differences between the in-kernel EUP tanh and XLA's
    # sigmoid/tanh expansions.
    assert jnp.allclose(out, ref, atol=2e-5, rtol=2e-5), "mismatch vs reference"

    print("KERNEL_OK")
</pallas_src>

<mosaic_0001>
module attributes {stable_mosaic.version = 11 : i64} {
  func.func @_pollution_lstm_kernel(%arg0: memref<16x4xf32, #tpu.memory_space<vmem>>, %arg1: memref<4x128xf32, #tpu.memory_space<vmem>>, %arg2: memref<1x128xf32, #tpu.memory_space<vmem>>, %arg3: memref<32x128xf32, #tpu.memory_space<vmem>>, %arg4: memref<1x32xf32, #tpu.memory_space<vmem>>, %arg5: memref<1x1xf32, #tpu.memory_space<vmem>>, %arg6: memref<2x1xf32, #tpu.memory_space<vmem>>) attributes {dimension_semantics = [], scalar_prefetch = 0 : i64, scratch_operands = 0 : i64, tpu.core_type = #tpu.core_type<tc>} {
    %cst = arith.constant 5.000000e-01 : f32
    %0 = vector.broadcast %cst : f32 to vector<1x64xf32>
    %cst_0 = arith.constant 1.000000e+00 : f32
    %1 = vector.broadcast %cst_0 : f32 to vector<1x32xf32>
    %cst_1 = arith.constant 5.000000e-01 : f32
    %2 = vector.broadcast %cst_1 : f32 to vector<1x32xf32>
    %3 = tpu.concatenate %0, %1, %2 in 1 : vector<1x64xf32>, vector<1x32xf32>, vector<1x32xf32> -> vector<1x128xf32>
    %c0 = arith.constant 0 : index
    %c0_2 = arith.constant 0 : index
    %4 = vector.load %arg0[%c0, %c0_2] : memref<16x4xf32, #tpu.memory_space<vmem>>, vector<16x4xf32>
    %c0_3 = arith.constant 0 : index
    %c0_4 = arith.constant 0 : index
    %5 = vector.load %arg1[%c0_3, %c0_4] : memref<4x128xf32, #tpu.memory_space<vmem>>, vector<4x128xf32>
    %cst_5 = arith.constant dense<0.000000e+00> : vector<16x128xf32>
    %6 = tpu.matmul %4, %5, %cst_5 {dimension_numbers = #tpu.dot_dimension_numbers<[1], [0], [0], [1], [0, 0, 1, 1], [], []>, precision = #tpu.contract_precision<fp32>} : vector<16x4xf32>, vector<4x128xf32>, vector<16x128xf32> -> vector<16x128xf32>
    %c0_6 = arith.constant 0 : index
    %c0_7 = arith.constant 0 : index
    %7 = vector.load %arg2[%c0_6, %c0_7] : memref<1x128xf32, #tpu.memory_space<vmem>>, vector<1x128xf32>
    %8 = vector.broadcast %7 : vector<1x128xf32> to vector<16x128xf32>
    %9 = arith.addf %6, %8 : vector<16x128xf32>
    %10 = vector.broadcast %3 : vector<1x128xf32> to vector<16x128xf32>
    %11 = arith.mulf %9, %10 : vector<16x128xf32>
    %c0_8 = arith.constant 0 : index
    %c0_9 = arith.constant 0 : index
    %12 = vector.load %arg3[%c0_8, %c0_9] : memref<32x128xf32, #tpu.memory_space<vmem>>, vector<32x128xf32>
    %13 = vector.broadcast %3 : vector<1x128xf32> to vector<32x128xf32>
    %14 = arith.mulf %12, %13 : vector<32x128xf32>
    %cst_10 = arith.constant 0.000000e+00 : f32
    %15 = vector.broadcast %cst_10 : f32 to vector<2x32xf32>
    %cst_11 = arith.constant 0.000000e+00 : f32
    %16 = vector.broadcast %cst_11 : f32 to vector<2x32xf32>
    %17 = vector.extract_strided_slice %11 {offsets = [0, 0], sizes = [2, 128], strides = [1, 1]} : vector<16x128xf32> to vector<2x128xf32>
    %cst_12 = arith.constant dense<0.000000e+00> : vector<2x128xf32>
    %18 = tpu.matmul %15, %14, %cst_12 {dimension_numbers = #tpu.dot_dimension_numbers<[1], [0], [0], [1], [0, 0, 1, 1], [], []>, precision = #tpu.contract_precision<fp32>} : vector<2x32xf32>, vector<32x128xf32>, vector<2x128xf32> -> vector<2x128xf32>
    %19 = arith.addf %17, %18 : vector<2x128xf32>
    %20 = math.tanh %19 : vector<2x128xf32>
    %21 = vector.extract_strided_slice %20 {offsets = [0, 0], sizes = [2, 32], strides = [1, 1]} : vector<2x128xf32> to vector<2x32xf32>
    %cst_13 = arith.constant 5.000000e-01 : f32
    %22 = vector.broadcast %cst_13 : f32 to vector<2x32xf32>
    %23 = arith.mulf %22, %21 : vector<2x32xf32>
    %cst_14 = arith.constant 5.000000e-01 : f32
    %24 = vector.broadcast %cst_14 : f32 to vector<2x32xf32>
    %25 = arith.addf %23, %24 : vector<2x32xf32>
    %26 = vector.extract_strided_slice %20 {offsets = [0, 32], sizes = [2, 32], strides = [1, 1]} : vector<2x128xf32> to vector<2x32xf32>
    %cst_15 = arith.constant 5.000000e-01 : f32
    %27 = vector.broadcast %cst_15 : f32 to vector<2x32xf32>
    %28 = arith.mulf %27, %26 : vector<2x32xf32>
    %cst_16 = arith.constant 5.000000e-01 : f32
    %29 = vector.broadcast %cst_16 : f32 to vector<2x32xf32>
    %30 = arith.addf %28, %29 : vector<2x32xf32>
    %31 = vector.extract_strided_slice %20 {offsets = [0, 64], sizes = [2, 32], strides = [1, 1]} : vector<2x128xf32> to vector<2x32xf32>
    %32 = vector.extract_strided_slice %20 {offsets = [0, 96], sizes = [2, 32], strides = [1, 1]} : vector<2x128xf32> to vector<2x32xf32>
    %cst_17 = arith.constant 5.000000e-01 : f32
    %33 = vector.broadcast %cst_17 : f32 to vector<2x32xf32>
    %34 = arith.mulf %33, %32 : vector<2x32xf32>
    %cst_18 = arith.constant 5.000000e-01 : f32
    %35 = vector.broadcast %cst_18 : f32 to vector<2x32xf32>
    %36 = arith.addf %34, %35 : vector<2x32xf32>
    %37 = arith.mulf %30, %16 : vector<2x32xf32>
    %38 = arith.mulf %25, %31 : vector<2x32xf32>
    %39 = arith.addf %37, %38 : vector<2x32xf32>
    %40 = math.tanh %39 : vector<2x32xf32>
    %41 = arith.mulf %36, %40 : vector<2x32xf32>
    %42 = vector.extract_strided_slice %11 {offsets = [2, 0], sizes = [2, 128], strides = [1, 1]} : vector<16x128xf32> to vector<2x128xf32>
    %cst_19 = arith.constant dense<0.000000e+00> : vector<2x128xf32>
    %43 = tpu.matmul %41, %14, %cst_19 {dimension_numbers = #tpu.dot_dimension_numbers<[1], [0], [0], [1], [0, 0, 1, 1], [], []>, precision = #tpu.contract_precision<fp32>} : vector<2x32xf32>, vector<32x128xf32>, vector<2x128xf32> -> vector<2x128xf32>
    %44 = arith.addf %42, %43 : vector<2x128xf32>
    %45 = math.tanh %44 : vector<2x128xf32>
    %46 = vector.extract_strided_slice %45 {offsets = [0, 0], sizes = [2, 32], strides = [1, 1]} : vector<2x128xf32> to vector<2x32xf32>
    %cst_20 = arith.constant 5.000000e-01 : f32
    %47 = vector.broadcast %cst_20 : f32 to vector<2x32xf32>
    %48 = arith.mulf %47, %46 : vector<2x32xf32>
    %cst_21 = arith.constant 5.000000e-01 : f32
    %49 = vector.broadcast %cst_21 : f32 to vector<2x32xf32>
    %50 = arith.addf %48, %49 : vector<2x32xf32>
    %51 = vector.extract_strided_slice %45 {offsets = [0, 32], sizes = [2, 32], strides = [1, 1]} : vector<2x128xf32> to vector<2x32xf32>
    %cst_22 = arith.constant 5.000000e-01 : f32
    %52 = vector.broadcast %cst_22 : f32 to vector<2x32xf32>
    %53 = arith.mulf %52, %51 : vector<2x32xf32>
    %cst_23 = arith.constant 5.000000e-01 : f32
    %54 = vector.broadcast %cst_23 : f32 to vector<2x32xf32>
    %55 = arith.addf %53, %54 : vector<2x32xf32>
    %56 = vector.extract_strided_slice %45 {offsets = [0, 64], sizes = [2, 32], strides = [1, 1]} : vector<2x128xf32> to vector<2x32xf32>
    %57 = vector.extract_strided_slice %45 {offsets = [0, 96], sizes = [2, 32], strides = [1, 1]} : vector<2x128xf32> to vector<2x32xf32>
    %cst_24 = arith.constant 5.000000e-01 : f32
    %58 = vector.broadcast %cst_24 : f32 to vector<2x32xf32>
    %59 = arith.mulf %58, %57 : vector<2x32xf32>
    %cst_25 = arith.constant 5.000000e-01 : f32
    %60 = vector.broadcast %cst_25 : f32 to vector<2x32xf32>
    %61 = arith.addf %59, %60 : vector<2x32xf32>
    %62 = arith.mulf %55, %39 : vector<2x32xf32>
    %63 = arith.mulf %50, %56 : vector<2x32xf32>
    %64 = arith.addf %62, %63 : vector<2x32xf32>
    %65 = math.tanh %64 : vector<2x32xf32>
    %66 = arith.mulf %61, %65 : vector<2x32xf32>
    %67 = vector.extract_strided_slice %11 {offsets = [4, 0], sizes = [2, 128], strides = [1, 1]} : vector<16x128xf32> to vector<2x128xf32>
    %cst_26 = arith.constant dense<0.000000e+00> : vector<2x128xf32>
    %68 = tpu.matmul %66, %14, %cst_26 {dimension_numbers = #tpu.dot_dimension_numbers<[1], [0], [0], [1], [0, 0, 1, 1], [], []>, precision = #tpu.contract_precision<fp32>} : vector<2x32xf32>, vector<32x128xf32>, vector<2x128xf32> -> vector<2x128xf32>
    %69 = arith.addf %67, %68 : vector<2x128xf32>
    %70 = math.tanh %69 : vector<2x128xf32>
    %71 = vector.extract_strided_slice %70 {offsets = [0, 0], sizes = [2, 32], strides = [1, 1]} : vector<2x128xf32> to vector<2x32xf32>
    %cst_27 = arith.constant 5.000000e-01 : f32
    %72 = vector.broadcast %cst_27 : f32 to vector<2x32xf32>
    %73 = arith.mulf %72, %71 : vector<2x32xf32>
    %cst_28 = arith.constant 5.000000e-01 : f32
    %74 = vector.broadcast %cst_28 : f32 to vector<2x32xf32>
    %75 = arith.addf %73, %74 : vector<2x32xf32>
    %76 = vector.extract_strided_slice %70 {offsets = [0, 32], sizes = [2, 32], strides = [1, 1]} : vector<2x128xf32> to vector<2x32xf32>
    %cst_29 = arith.constant 5.000000e-01 : f32
    %77 = vector.broadcast %cst_29 : f32 to vector<2x32xf32>
    %78 = arith.mulf %77, %76 : vector<2x32xf32>
    %cst_30 = arith.constant 5.000000e-01 : f32
    %79 = vector.broadcast %cst_30 : f32 to vector<2x32xf32>
    %80 = arith.addf %78, %79 : vector<2x32xf32>
    %81 = vector.extract_strided_slice %70 {offsets = [0, 64], sizes = [2, 32], strides = [1, 1]} : vector<2x128xf32> to vector<2x32xf32>
    %82 = vector.extract_strided_slice %70 {offsets = [0, 96], sizes = [2, 32], strides = [1, 1]} : vector<2x128xf32> to vector<2x32xf32>
    %cst_31 = arith.constant 5.000000e-01 : f32
    %83 = vector.broadcast %cst_31 : f32 to vector<2x32xf32>
    %84 = arith.mulf %83, %82 : vector<2x32xf32>
    %cst_32 = arith.constant 5.000000e-01 : f32
    %85 = vector.broadcast %cst_32 : f32 to vector<2x32xf32>
    %86 = arith.addf %84, %85 : vector<2x32xf32>
    %87 = arith.mulf %80, %64 : vector<2x32xf32>
    %88 = arith.mulf %75, %81 : vector<2x32xf32>
    %89 = arith.addf %87, %88 : vector<2x32xf32>
    %90 = math.tanh %89 : vector<2x32xf32>
    %91 = arith.mulf %86, %90 : vector<2x32xf32>
    %92 = vector.extract_strided_slice %11 {offsets = [6, 0], sizes = [2, 128], strides = [1, 1]} : vector<16x128xf32> to vector<2x128xf32>
    %cst_33 = arith.constant dense<0.000000e+00> : vector<2x128xf32>
    %93 = tpu.matmul %91, %14, %cst_33 {dimension_numbers = #tpu.dot_dimension_numbers<[1], [0], [0], [1], [0, 0, 1, 1], [], []>, precision = #tpu.contract_precision<fp32>} : vector<2x32xf32>, vector<32x128xf32>, vector<2x128xf32> -> vector<2x128xf32>
    %94 = arith.addf %92, %93 : vector<2x128xf32>
    %95 = math.tanh %94 : vector<2x128xf32>
    %96 = vector.extract_strided_slice %95 {offsets = [0, 0], sizes = [2, 32], strides = [1, 1]} : vector<2x128xf32> to vector<2x32xf32>
    %cst_34 = arith.constant 5.000000e-01 : f32
    %97 = vector.broadcast %cst_34 : f32 to vector<2x32xf32>
    %98 = arith.mulf %97, %96 : vector<2x32xf32>
    %cst_35 = arith.constant 5.000000e-01 : f32
    %99 = vector.broadcast %cst_35 : f32 to vector<2x32xf32>
    %100 = arith.addf %98, %99 : vector<2x32xf32>
    %101 = vector.extract_strided_slice %95 {offsets = [0, 32], sizes = [2, 32], strides = [1, 1]} : vector<2x128xf32> to vector<2x32xf32>
    %cst_36 = arith.constant 5.000000e-01 : f32
    %102 = vector.broadcast %cst_36 : f32 to vector<2x32xf32>
    %103 = arith.mulf %102, %101 : vector<2x32xf32>
    %cst_37 = arith.constant 5.000000e-01 : f32
    %104 = vector.broadcast %cst_37 : f32 to vector<2x32xf32>
    %105 = arith.addf %103, %104 : vector<2x32xf32>
    %106 = vector.extract_strided_slice %95 {offsets = [0, 64], sizes = [2, 32], strides = [1, 1]} : vector<2x128xf32> to vector<2x32xf32>
    %107 = vector.extract_strided_slice %95 {offsets = [0, 96], sizes = [2, 32], strides = [1, 1]} : vector<2x128xf32> to vector<2x32xf32>
    %cst_38 = arith.constant 5.000000e-01 : f32
    %108 = vector.broadcast %cst_38 : f32 to vector<2x32xf32>
    %109 = arith.mulf %108, %107 : vector<2x32xf32>
    %cst_39 = arith.constant 5.000000e-01 : f32
    %110 = vector.broadcast %cst_39 : f32 to vector<2x32xf32>
    %111 = arith.addf %109, %110 : vector<2x32xf32>
    %112 = arith.mulf %105, %89 : vector<2x32xf32>
    %113 = arith.mulf %100, %106 : vector<2x32xf32>
    %114 = arith.addf %112, %113 : vector<2x32xf32>
    %115 = math.tanh %114 : vector<2x32xf32>
    %116 = arith.mulf %111, %115 : vector<2x32xf32>
    %117 = vector.extract_strided_slice %11 {offsets = [8, 0], sizes = [2, 128], strides = [1, 1]} : vector<16x128xf32> to vector<2x128xf32>
    %cst_40 = arith.constant dense<0.000000e+00> : vector<2x128xf32>
    %118 = tpu.matmul %116, %14, %cst_40 {dimension_numbers = #tpu.dot_dimension_numbers<[1], [0], [0], [1], [0, 0, 1, 1], [], []>, precision = #tpu.contract_precision<fp32>} : vector<2x32xf32>, vector<32x128xf32>, vector<2x128xf32> -> vector<2x128xf32>
    %119 = arith.addf %117, %118 : vector<2x128xf32>
    %120 = math.tanh %119 : vector<2x128xf32>
    %121 = vector.extract_strided_slice %120 {offsets = [0, 0], sizes = [2, 32], strides = [1, 1]} : vector<2x128xf32> to vector<2x32xf32>
    %cst_41 = arith.constant 5.000000e-01 : f32
    %122 = vector.broadcast %cst_41 : f32 to vector<2x32xf32>
    %123 = arith.mulf %122, %121 : vector<2x32xf32>
    %cst_42 = arith.constant 5.000000e-01 : f32
    %124 = vector.broadcast %cst_42 : f32 to vector<2x32xf32>
    %125 = arith.addf %123, %124 : vector<2x32xf32>
    %126 = vector.extract_strided_slice %120 {offsets = [0, 32], sizes = [2, 32], strides = [1, 1]} : vector<2x128xf32> to vector<2x32xf32>
    %cst_43 = arith.constant 5.000000e-01 : f32
    %127 = vector.broadcast %cst_43 : f32 to vector<2x32xf32>
    %128 = arith.mulf %127, %126 : vector<2x32xf32>
    %cst_44 = arith.constant 5.000000e-01 : f32
    %129 = vector.broadcast %cst_44 : f32 to vector<2x32xf32>
    %130 = arith.addf %128, %129 : vector<2x32xf32>
    %131 = vector.extract_strided_slice %120 {offsets = [0, 64], sizes = [2, 32], strides = [1, 1]} : vector<2x128xf32> to vector<2x32xf32>
    %132 = vector.extract_strided_slice %120 {offsets = [0, 96], sizes = [2, 32], strides = [1, 1]} : vector<2x128xf32> to vector<2x32xf32>
    %cst_45 = arith.constant 5.000000e-01 : f32
    %133 = vector.broadcast %cst_45 : f32 to vector<2x32xf32>
    %134 = arith.mulf %133, %132 : vector<2x32xf32>
    %cst_46 = arith.constant 5.000000e-01 : f32
    %135 = vector.broadcast %cst_46 : f32 to vector<2x32xf32>
    %136 = arith.addf %134, %135 : vector<2x32xf32>
    %137 = arith.mulf %130, %114 : vector<2x32xf32>
    %138 = arith.mulf %125, %131 : vector<2x32xf32>
    %139 = arith.addf %137, %138 : vector<2x32xf32>
    %140 = math.tanh %139 : vector<2x32xf32>
    %141 = arith.mulf %136, %140 : vector<2x32xf32>
    %142 = vector.extract_strided_slice %11 {offsets = [10, 0], sizes = [2, 128], strides = [1, 1]} : vector<16x128xf32> to vector<2x128xf32>
    %cst_47 = arith.constant dense<0.000000e+00> : vector<2x128xf32>
    %143 = tpu.matmul %141, %14, %cst_47 {dimension_numbers = #tpu.dot_dimension_numbers<[1], [0], [0], [1], [0, 0, 1, 1], [], []>, precision = #tpu.contract_precision<fp32>} : vector<2x32xf32>, vector<32x128xf32>, vector<2x128xf32> -> vector<2x128xf32>
    %144 = arith.addf %142, %143 : vector<2x128xf32>
    %145 = math.tanh %144 : vector<2x128xf32>
    %146 = vector.extract_strided_slice %145 {offsets = [0, 0], sizes = [2, 32], strides = [1, 1]} : vector<2x128xf32> to vector<2x32xf32>
    %cst_48 = arith.constant 5.000000e-01 : f32
    %147 = vector.broadcast %cst_48 : f32 to vector<2x32xf32>
    %148 = arith.mulf %147, %146 : vector<2x32xf32>
    %cst_49 = arith.constant 5.000000e-01 : f32
    %149 = vector.broadcast %cst_49 : f32 to vector<2x32xf32>
    %150 = arith.addf %148, %149 : vector<2x32xf32>
    %151 = vector.extract_strided_slice %145 {offsets = [0, 32], sizes = [2, 32], strides = [1, 1]} : vector<2x128xf32> to vector<2x32xf32>
    %cst_50 = arith.constant 5.000000e-01 : f32
    %152 = vector.broadcast %cst_50 : f32 to vector<2x32xf32>
    %153 = arith.mulf %152, %151 : vector<2x32xf32>
    %cst_51 = arith.constant 5.000000e-01 : f32
    %154 = vector.broadcast %cst_51 : f32 to vector<2x32xf32>
    %155 = arith.addf %153, %154 : vector<2x32xf32>
    %156 = vector.extract_strided_slice %145 {offsets = [0, 64], sizes = [2, 32], strides = [1, 1]} : vector<2x128xf32> to vector<2x32xf32>
    %157 = vector.extract_strided_slice %145 {offsets = [0, 96], sizes = [2, 32], strides = [1, 1]} : vector<2x128xf32> to vector<2x32xf32>
    %cst_52 = arith.constant 5.000000e-01 : f32
    %158 = vector.broadcast %cst_52 : f32 to vector<2x32xf32>
    %159 = arith.mulf %158, %157 : vector<2x32xf32>
    %cst_53 = arith.constant 5.000000e-01 : f32
    %160 = vector.broadcast %cst_53 : f32 to vector<2x32xf32>
    %161 = arith.addf %159, %160 : vector<2x32xf32>
    %162 = arith.mulf %155, %139 : vector<2x32xf32>
    %163 = arith.mulf %150, %156 : vector<2x32xf32>
    %164 = arith.addf %162, %163 : vector<2x32xf32>
    %165 = math.tanh %164 : vector<2x32xf32>
    %166 = arith.mulf %161, %165 : vector<2x32xf32>
    %167 = vector.extract_strided_slice %11 {offsets = [12, 0], sizes = [2, 128], strides = [1, 1]} : vector<16x128xf32> to vector<2x128xf32>
    %cst_54 = arith.constant dense<0.000000e+00> : vector<2x128xf32>
    %168 = tpu.matmul %166, %14, %cst_54 {dimension_numbers = #tpu.dot_dimension_numbers<[1], [0], [0], [1], [0, 0, 1, 1], [], []>, precision = #tpu.contract_precision<fp32>} : vector<2x32xf32>, vector<32x128xf32>, vector<2x128xf32> -> vector<2x128xf32>
    %169 = arith.addf %167, %168 : vector<2x128xf32>
    %170 = math.tanh %169 : vector<2x128xf32>
    %171 = vector.extract_strided_slice %170 {offsets = [0, 0], sizes = [2, 32], strides = [1, 1]} : vector<2x128xf32> to vector<2x32xf32>
    %cst_55 = arith.constant 5.000000e-01 : f32
    %172 = vector.broadcast %cst_55 : f32 to vector<2x32xf32>
    %173 = arith.mulf %172, %171 : vector<2x32xf32>
    %cst_56 = arith.constant 5.000000e-01 : f32
    %174 = vector.broadcast %cst_56 : f32 to vector<2x32xf32>
    %175 = arith.addf %173, %174 : vector<2x32xf32>
    %176 = vector.extract_strided_slice %170 {offsets = [0, 32], sizes = [2, 32], strides = [1, 1]} : vector<2x128xf32> to vector<2x32xf32>
    %cst_57 = arith.constant 5.000000e-01 : f32
    %177 = vector.broadcast %cst_57 : f32 to vector<2x32xf32>
    %178 = arith.mulf %177, %176 : vector<2x32xf32>
    %cst_58 = arith.constant 5.000000e-01 : f32
    %179 = vector.broadcast %cst_58 : f32 to vector<2x32xf32>
    %180 = arith.addf %178, %179 : vector<2x32xf32>
    %181 = vector.extract_strided_slice %170 {offsets = [0, 64], sizes = [2, 32], strides = [1, 1]} : vector<2x128xf32> to vector<2x32xf32>
    %182 = vector.extract_strided_slice %170 {offsets = [0, 96], sizes = [2, 32], strides = [1, 1]} : vector<2x128xf32> to vector<2x32xf32>
    %cst_59 = arith.constant 5.000000e-01 : f32
    %183 = vector.broadcast %cst_59 : f32 to vector<2x32xf32>
    %184 = arith.mulf %183, %182 : vector<2x32xf32>
    %cst_60 = arith.constant 5.000000e-01 : f32
    %185 = vector.broadcast %cst_60 : f32 to vector<2x32xf32>
    %186 = arith.addf %184, %185 : vector<2x32xf32>
    %187 = arith.mulf %180, %164 : vector<2x32xf32>
    %188 = arith.mulf %175, %181 : vector<2x32xf32>
    %189 = arith.addf %187, %188 : vector<2x32xf32>
    %190 = math.tanh %189 : vector<2x32xf32>
    %191 = arith.mulf %186, %190 : vector<2x32xf32>
    %192 = vector.extract_strided_slice %11 {offsets = [14, 0], sizes = [2, 128], strides = [1, 1]} : vector<16x128xf32> to vector<2x128xf32>
    %cst_61 = arith.constant dense<0.000000e+00> : vector<2x128xf32>
    %193 = tpu.matmul %191, %14, %cst_61 {dimension_numbers = #tpu.dot_dimension_numbers<[1], [0], [0], [1], [0, 0, 1, 1], [], []>, precision = #tpu.contract_precision<fp32>} : vector<2x32xf32>, vector<32x128xf32>, vector<2x128xf32> -> vector<2x128xf32>
    %194 = arith.addf %192, %193 : vector<2x128xf32>
    %195 = math.tanh %194 : vector<2x128xf32>
    %196 = vector.extract_strided_slice %195 {offsets = [0, 0], sizes = [2, 32], strides = [1, 1]} : vector<2x128xf32> to vector<2x32xf32>
    %cst_62 = arith.constant 5.000000e-01 : f32
    %197 = vector.broadcast %cst_62 : f32 to vector<2x32xf32>
    %198 = arith.mulf %197, %196 : vector<2x32xf32>
    %cst_63 = arith.constant 5.000000e-01 : f32
    %199 = vector.broadcast %cst_63 : f32 to vector<2x32xf32>
    %200 = arith.addf %198, %199 : vector<2x32xf32>
    %201 = vector.extract_strided_slice %195 {offsets = [0, 32], sizes = [2, 32], strides = [1, 1]} : vector<2x128xf32> to vector<2x32xf32>
    %cst_64 = arith.constant 5.000000e-01 : f32
    %202 = vector.broadcast %cst_64 : f32 to vector<2x32xf32>
    %203 = arith.mulf %202, %201 : vector<2x32xf32>
    %cst_65 = arith.constant 5.000000e-01 : f32
    %204 = vector.broadcast %cst_65 : f32 to vector<2x32xf32>
    %205 = arith.addf %203, %204 : vector<2x32xf32>
    %206 = vector.extract_strided_slice %195 {offsets = [0, 64], sizes = [2, 32], strides = [1, 1]} : vector<2x128xf32> to vector<2x32xf32>
    %207 = vector.extract_strided_slice %195 {offsets = [0, 96], sizes = [2, 32], strides = [1, 1]} : vector<2x128xf32> to vector<2x32xf32>
    %cst_66 = arith.constant 5.000000e-01 : f32
    %208 = vector.broadcast %cst_66 : f32 to vector<2x32xf32>
    %209 = arith.mulf %208, %207 : vector<2x32xf32>
    %cst_67 = arith.constant 5.000000e-01 : f32
    %210 = vector.broadcast %cst_67 : f32 to vector<2x32xf32>
    %211 = arith.addf %209, %210 : vector<2x32xf32>
    %212 = arith.mulf %205, %189 : vector<2x32xf32>
    %213 = arith.mulf %200, %206 : vector<2x32xf32>
    %214 = arith.addf %212, %213 : vector<2x32xf32>
    %215 = math.tanh %214 : vector<2x32xf32>
    %216 = arith.mulf %211, %215 : vector<2x32xf32>
    %c0_68 = arith.constant 0 : index
    %c0_69 = arith.constant 0 : index
    %217 = vector.load %arg4[%c0_68, %c0_69] : memref<1x32xf32, #tpu.memory_space<vmem>>, vector<1x32xf32>
    %218 = vector.broadcast %217 : vector<1x32xf32> to vector<2x32xf32>
    %219 = arith.mulf %216, %218 : vector<2x32xf32>
    %cst_70 = arith.constant dense<0.000000e+00> : vector<2xf32>
    %220 = vector.multi_reduction <add>, %219, %cst_70 [1] : vector<2x32xf32> to vector<2xf32>
    %221 = vector.shape_cast %220 : vector<2xf32> to vector<2x1xf32>
    %c0_71 = arith.constant 0 : index
    %c0_72 = arith.constant 0 : index
    %222 = vector.load %arg5[%c0_71, %c0_72] : memref<1x1xf32, #tpu.memory_space<vmem>>, vector<1x1xf32>
    %223 = vector.broadcast %222 : vector<1x1xf32> to vector<2x1xf32>
    %224 = arith.addf %221, %223 : vector<2x1xf32>
    %c0_73 = arith.constant 0 : index
    %c0_74 = arith.constant 0 : index
    %225 = vector.load %arg6[%c0_73, %c0_74] : memref<2x1xf32, #tpu.memory_space<vmem>>, vector<2x1xf32>
    tpu.vector_store %arg6[%c0_73, %c0_74], %224 {strides = array<i32>} : memref<2x1xf32, #tpu.memory_space<vmem>>, vector<2x1xf32>,
    return
  }
}

</mosaic_0001>

<llo_original>
// kernel: tpu_custom_call.1
$region0: #{tpu_custom_call.1}
  #allocation0 [shape = 'u32[]', space=smem, size = 0x4, offset = 0x4, fixed_abs, tag = 'smem constant byte address 0x4 - core index']
  #allocation1 [shape = 'u32[72,128]{1,0:T(1,128)}', space=vmem, size = 0x9000, scoped, tag = 'internal scratch']
  #allocation2 [shape = 'f32[1,1]{1,0:T(1,128)S(1)}', space=vmem, size = 0x200, scoped, tag = 'scoped memory for tpu_custom_call.1']
  %s0 = inlined_call_operand.vmem [shape: f32[16,4], index: 0, kind: input, shape index: {}]
  %s1 = inlined_call_operand.vmem [shape: f32[4,128], index: 1, kind: input, shape index: {}]
  %s2 = inlined_call_operand.vmem [shape: f32[1,128], index: 2, kind: input, shape index: {}]
  %s3 = inlined_call_operand.hbm [shape: f32[32,128], index: 3, kind: input, shape index: {}]
  %s4 = inlined_call_operand.vmem [shape: f32[1,32], index: 4, kind: input, shape index: {}]
  %s5 = inlined_call_operand.<no memory space> [shape: f32[1,1], index: 5, kind: input, shape index: {}]
  %s6 = inlined_call_operand.vmem [shape: f32[2,1], index: 6, kind: output, shape index: {}]
  %s7 = sld [smem:[#allocation0]]
  $region38: #{tpu_custom_call.1} parent=0
    _
  %s9 = ssub.s32 1, %s7
  %s10 = scalar_select 0, %s9, %s7
  %v11 = vstv %s5
  %12 = vst [vmem:[#allocation2] sm:$0x1] %v11
  $region1: #{tpu_custom_call.1} parent=0
    #allocation3 [shape = 'u8[16384]{0}', space=vmem, size = 0x4000, scoped, tag = 'input window, operand 3, single buffered']
    #allocation4 [shape = 's32[1]{0}', space=sflag, size = 0x4, scoped, tag = 'scoped memory for tpu_custom_call.1']
    %13 = vsyncpa [#allocation4], 0
    // Predicated region
    $region2: #{tpu_custom_call.1} parent=1 // pred_check
      _
    $region3: #{tpu_custom_call.1} parent=1 // pred_check_branch
      %15 = sbr.rel (0) target = $region5
    $region4: #{tpu_custom_call.1} parent=1 // pred_region
      _
    $region5: #{tpu_custom_call.1} parent=1 // pred_fallthru
      _
    // Predicated region
    $region6: #{tpu_custom_call.1} parent=1 // pred_check
      _
    $region7: #{tpu_custom_call.1} parent=1 // pred_check_branch
      %17 = sbr.rel (0) target = $region9
    $region8: #{tpu_custom_call.1} parent=1 // pred_region
      _
    $region9: #{tpu_custom_call.1} parent=1 // pred_fallthru
      _
    // Predicated region
    $region10: #{tpu_custom_call.1} parent=1 // pred_check
      _
    $region11: #{tpu_custom_call.1} parent=1 // pred_check_branch
      %19 = sbr.rel (0) target = $region13
    $region12: #{tpu_custom_call.1} parent=1 // pred_region
      _
    $region13: #{tpu_custom_call.1} parent=1 // pred_fallthru
      _
    // Predicated region
    $region14: #{tpu_custom_call.1} parent=1 // pred_check
      _
    $region15: #{tpu_custom_call.1} parent=1 // pred_check_branch
      %21 = sbr.rel (0) target = $region17
    $region16: #{tpu_custom_call.1} parent=1 // pred_region
      %23 = vsyncadd [#allocation4], 0
      %s24 = sshll.u32 %s3, 4
      %s25 = int_to_ptr.hbm [resolvable:$true] %s24
      %s26 = sshll.u32 [#allocation3], 4
      %s27 = int_to_ptr.vmem [resolvable:$true] %s26
      %32 = dma.hbm_to_vmem [thread:$0]  %s25, 512, %s27, [#allocation4], 128, 128, 8
    $region17: #{tpu_custom_call.1} parent=1 // pred_fallthru
      _
    // Predicated region
    $region18: #{tpu_custom_call.1} parent=1 // pred_check
      _
    $region19: #{tpu_custom_call.1} parent=1 // pred_check_branch
      %34 = sbr.rel (0) target = $region21
    $region20: #{tpu_custom_call.1} parent=1 // pred_region
      _
    $region21: #{tpu_custom_call.1} parent=1 // pred_fallthru
      _
    // Predicated region
    $region22: #{tpu_custom_call.1} parent=1 // pred_check
      _
    $region23: #{tpu_custom_call.1} parent=1 // pred_check_branch
      %36 = sbr.rel (0) target = $region25
    $region24: #{tpu_custom_call.1} parent=1 // pred_region
      _
    $region25: #{tpu_custom_call.1} parent=1 // pred_fallthru
      _
    // Predicated region
    $region26: #{tpu_custom_call.1} parent=1 // pred_check
      _
    $region27: #{tpu_custom_call.1} parent=1 // pred_check_branch
      %38 = sbr.rel (0) target = $region29
    $region28: #{tpu_custom_call.1} parent=1 // pred_region
      %40 = dma.done [#allocation4], 512
    $region29: #{tpu_custom_call.1} parent=1 // pred_fallthru
      _
    %vm41 = vcmask 523264
    %v42 = vsel %vm41, 0.5, 1.0
    %vm43 = vcmask 785408
    %v44 = vsel %vm43, %v42, 0.5
    %v45 = vld [vmem:[%s0] sm:$0xff]
    %v46 = vld [vmem:[%s0 + $0x8] sm:$0xff]
    %v47 = vld [vmem:[%s1] sm:$0xf]
    %v48 = vld [vmem:[%s2] sm:$0x1]
    %v50 = vperm.slane %v48, 0
    %vm52 = vcmask 31744
    %v54 = vsel %vm52, %v45, 0
    %v57 = vsel %vm52, %v46, 0
    %vm59 = vcmask 1043456
    %v61 = vsel %vm59, %v47, 0
    %63 = vmatpush.msra.mxu0 0.0
    %64 = vmatpush.msra.mxu0 0.0
    %65 = vmatpush.msra.mxu0 0.0
    %66 = vmatpush.msra.mxu0 0.0
    %67 = vmatpush.msra.mxu0 0.0
    %68 = vmatpush.msra.mxu0 0.0
    %69 = vmatpush.msra.mxu0 0.0
    %70 = vmatpush.msra.mxu0 0.0
    %71 = vmatpush.msra.mxu0 0.0
    %72 = vmatpush.msra.mxu0 0.0
    %73 = vmatpush.msra.mxu0 0.0
    %74 = vmatpush.msra.mxu0 0.0
    %75 = vmatpush.msra.mxu0 0.0
    %76 = vmatpush.msra.mxu0 0.0
    %77 = vmatpush.msra.mxu0 0.0
    %v78 = vand.u32 %v61, 4294901760
    %79 = vmatpush.msra.mxu0 %v78
    %v80 = vand.u32 %v54, 4294901760
    %v81 = vsub.f32 %v54, %v80
    %v82 = vand.u32 %v81, 4294901760
    %v83 = vsub.f32 %v81, %v82
    %v84 = vand.u32 %v83, 4294901760
    %85 = vmatmul.f32.gmra.mxu0 %v84
    %v86 = vpop.f32.mrf.mxu0
    %v87 = vadd.f32 %v50, %v86
    %v88 = vand.u32 %v57, 4294901760
    %v89 = vsub.f32 %v57, %v88
    %v90 = vand.u32 %v89, 4294901760
    %v91 = vsub.f32 %v89, %v90
    %v92 = vand.u32 %v91, 4294901760
    %93 = vmatmul.f32.gmra.mxu0 %v92
    %v94 = vpop.f32.mrf.mxu0
    %v95 = vadd.f32 %v50, %v94
    %96 = vdwg.mxu0
    %97 = vmatpush.msra.mxu0 0.0
    %98 = vmatpush.msra.mxu0 0.0
    %99 = vmatpush.msra.mxu0 0.0
    %100 = vmatpush.msra.mxu0 0.0
    %101 = vmatpush.msra.mxu0 0.0
    %102 = vmatpush.msra.mxu0 0.0
    %103 = vmatpush.msra.mxu0 0.0
    %104 = vmatpush.msra.mxu0 0.0
    %105 = vmatpush.msra.mxu0 0.0
    %106 = vmatpush.msra.mxu0 0.0
    %107 = vmatpush.msra.mxu0 0.0
    %108 = vmatpush.msra.mxu0 0.0
    %109 = vmatpush.msra.mxu0 0.0
    %110 = vmatpush.msra.mxu0 0.0
    %111 = vmatpush.msra.mxu0 0.0
    %v112 = vand.u32 %v61, 4294901760
    %v113 = vsub.f32 %v61, %v112
    %v114 = vand.u32 %v113, 4294901760
    %v115 = vsub.f32 %v113, %v114
    %v116 = vand.u32 %v115, 4294901760
    %117 = vmatpush.msra.mxu0 %v116
    %v118 = vand.u32 %v54, 4294901760
    %119 = vmatmul.f32.gmra.mxu0 %v118
    %v120 = vpop.f32.mrf.mxu0
    %v121 = vadd.f32 %v87, %v120
    %v122 = vand.u32 %v57, 4294901760
    %123 = vmatmul.f32.gmra.mxu0 %v122
    %v124 = vpop.f32.mrf.mxu0
    %v125 = vadd.f32 %v95, %v124
    %126 = vdwg.mxu0
    %127 = vmatpush.msra.mxu0 0.0
    %128 = vmatpush.msra.mxu0 0.0
    %129 = vmatpush.msra.mxu0 0.0
    %130 = vmatpush.msra.mxu0 0.0
    %131 = vmatpush.msra.mxu0 0.0
    %132 = vmatpush.msra.mxu0 0.0
    %133 = vmatpush.msra.mxu0 0.0
    %134 = vmatpush.msra.mxu0 0.0
    %135 = vmatpush.msra.mxu0 0.0
    %136 = vmatpush.msra.mxu0 0.0
    %137 = vmatpush.msra.mxu0 0.0
    %138 = vmatpush.msra.mxu0 0.0
    %139 = vmatpush.msra.mxu0 0.0
    %140 = vmatpush.msra.mxu0 0.0
    %141 = vmatpush.msra.mxu0 0.0
    %v142 = vand.u32 %v61, 4294901760
    %v143 = vsub.f32 %v61, %v142
    %144 = vmatpush.msra.mxu0 %v143
    %v145 = vand.u32 %v54, 4294901760
    %v146 = vsub.f32 %v54, %v145
    %147 = vmatmul.f32.gmra.mxu0 %v146
    %v148 = vpop.f32.mrf.mxu0
    %v149 = vadd.f32 %v121, %v148
    %v150 = vand.u32 %v57, 4294901760
    %v151 = vsub.f32 %v57, %v150
    %152 = vmatmul.f32.gmra.mxu0 %v151
    %v153 = vpop.f32.mrf.mxu0
    %v154 = vadd.f32 %v125, %v153
    %155 = vdwg.mxu0
    %156 = vmatpush.msra.mxu0 0.0
    %157 = vmatpush.msra.mxu0 0.0
    %158 = vmatpush.msra.mxu0 0.0
    %159 = vmatpush.msra.mxu0 0.0
    %160 = vmatpush.msra.mxu0 0.0
    %161 = vmatpush.msra.mxu0 0.0
    %162 = vmatpush.msra.mxu0 0.0
    %163 = vmatpush.msra.mxu0 0.0
    %164 = vmatpush.msra.mxu0 0.0
    %165 = vmatpush.msra.mxu0 0.0
    %166 = vmatpush.msra.mxu0 0.0
    %167 = vmatpush.msra.mxu0 0.0
    %168 = vmatpush.msra.mxu0 0.0
    %169 = vmatpush.msra.mxu0 0.0
    %170 = vmatpush.msra.mxu0 0.0
    %v171 = vand.u32 %v61, 4294901760
    %172 = vmatpush.msra.mxu0 %v171
    %v173 = vand.u32 %v54, 4294901760
    %v174 = vsub.f32 %v54, %v173
    %v175 = vand.u32 %v174, 4294901760
    %176 = vmatmul.f32.gmra.mxu0 %v175
    %v177 = vpop.f32.mrf.mxu0
    %v178 = vadd.f32 %v149, %v177
    %v179 = vand.u32 %v57, 4294901760
    %v180 = vsub.f32 %v57, %v179
    %v181 = vand.u32 %v180, 4294901760
    %182 = vmatmul.f32.gmra.mxu0 %v181
    %v183 = vpop.f32.mrf.mxu0
    %v184 = vadd.f32 %v154, %v183
    %185 = vdwg.mxu0
    %186 = vmatpush.msra.mxu0 0.0
    %187 = vmatpush.msra.mxu0 0.0
    %188 = vmatpush.msra.mxu0 0.0
    %189 = vmatpush.msra.mxu0 0.0
    %190 = vmatpush.msra.mxu0 0.0
    %191 = vmatpush.msra.mxu0 0.0
    %192 = vmatpush.msra.mxu0 0.0
    %193 = vmatpush.msra.mxu0 0.0
    %194 = vmatpush.msra.mxu0 0.0
    %195 = vmatpush.msra.mxu0 0.0
    %196 = vmatpush.msra.mxu0 0.0
    %197 = vmatpush.msra.mxu0 0.0
    %198 = vmatpush.msra.mxu0 0.0
    %199 = vmatpush.msra.mxu0 0.0
    %200 = vmatpush.msra.mxu0 0.0
    %v201 = vand.u32 %v61, 4294901760
    %v202 = vsub.f32 %v61, %v201
    %v203 = vand.u32 %v202, 4294901760
    %204 = vmatpush.msra.mxu0 %v203
    %v205 = vand.u32 %v54, 4294901760
    %206 = vmatmul.f32.gmra.mxu0 %v205
    %v207 = vpop.f32.mrf.mxu0
    %v208 = vadd.f32 %v178, %v207
    %v209 = vand.u32 %v57, 4294901760
    %210 = vmatmul.f32.gmra.mxu0 %v209
    %v211 = vpop.f32.mrf.mxu0
    %v212 = vadd.f32 %v184, %v211
    %213 = vdwg.mxu0
    %214 = vmatpush.msra.mxu0 0.0
    %215 = vmatpush.msra.mxu0 0.0
    %216 = vmatpush.msra.mxu0 0.0
    %217 = vmatpush.msra.mxu0 0.0
    %218 = vmatpush.msra.mxu0 0.0
    %219 = vmatpush.msra.mxu0 0.0
    %220 = vmatpush.msra.mxu0 0.0
    %221 = vmatpush.msra.mxu0 0.0
    %222 = vmatpush.msra.mxu0 0.0
    %223 = vmatpush.msra.mxu0 0.0
    %224 = vmatpush.msra.mxu0 0.0
    %225 = vmatpush.msra.mxu0 0.0
    %226 = vmatpush.msra.mxu0 0.0
    %227 = vmatpush.msra.mxu0 0.0
    %228 = vmatpush.msra.mxu0 0.0
    %v229 = vand.u32 %v61, 4294901760
    %230 = vmatpush.msra.mxu0 %v229
    %v231 = vand.u32 %v54, 4294901760
    %232 = vmatmul.f32.gmra.mxu0 %v231
    %v233 = vpop.f32.mrf.mxu0
    %v234 = vadd.f32 %v208, %v233
    %v235 = vand.u32 %v57, 4294901760
    %236 = vmatmul.f32.gmra.mxu0 %v235
    %v237 = vpop.f32.mrf.mxu0
    %v238 = vadd.f32 %v212, %v237
    %239 = vdwg.mxu0
    %v240 = vperm.slane %v44, 0
    %v241 = vmul.f32 %v234, %v240
    %v242 = vmul.f32 %v238, %v240
    %v243 = vld [vmem:[#allocation3] sm:$0xff]
    %v244 = vld [vmem:[#allocation3 + $0x8] sm:$0xff]
    %v245 = vld [vmem:[#allocation3 + $0x10] sm:$0xff]
    %v246 = vld [vmem:[#allocation3 + $0x18] sm:$0xff]
    %v247 = vmul.f32 %v243, %v240
    %v248 = vmul.f32 %v244, %v240
    %v249 = vmul.f32 %v245, %v240
    %v250 = vmul.f32 %v246, %v240
    %vm251 = vcmask 261120
    %v253 = vsel %vm251, 0.0, 0
    %255 = vmatpush.msra.mxu0 0.0
    %256 = vmatpush.msra.mxu0 0.0
    %257 = vmatpush.msra.mxu0 0.0
    %258 = vmatpush.msra.mxu0 0.0
    %259 = vmatpush.msra.mxu0 0.0
    %260 = vmatpush.msra.mxu0 0.0
    %261 = vmatpush.msra.mxu0 0.0
    %262 = vmatpush.msra.mxu0 0.0
    %263 = vmatpush.msra.mxu0 0.0
    %264 = vmatpush.msra.mxu0 0.0
    %265 = vmatpush.msra.mxu0 0.0
    %266 = vmatpush.msra.mxu0 0.0
    %v267 = vand.u32 %v250, 4294901760
    %268 = vmatpush.msra.mxu0 %v267
    %v269 = vand.u32 %v249, 4294901760
    %270 = vmatpush.msra.mxu0 %v269
    %v271 = vand.u32 %v248, 4294901760
    %272 = vmatpush.msra.mxu0 %v271
    %v273 = vand.u32 %v247, 4294901760
    %274 = vmatpush.msra.mxu0 %v273
    %v275 = vand.u32 %v253, 4294901760
    %v276 = vsub.f32 %v253, %v275
    %v277 = vand.u32 %v276, 4294901760
    %v278 = vsub.f32 %v276, %v277
    %v279 = vand.u32 %v278, 4294901760
    %280 = vmatmul.f32.gmra.mxu0 %v279
    %v281 = vpop.f32.mrf.mxu0
    %v282 = vadd.f32 0.0, %v281
    %283 = vdwg.mxu0
    %284 = vmatpush.msra.mxu0 0.0
    %285 = vmatpush.msra.mxu0 0.0
    %286 = vmatpush.msra.mxu0 0.0
    %287 = vmatpush.msra.mxu0 0.0
    %288 = vmatpush.msra.mxu0 0.0
    %289 = vmatpush.msra.mxu0 0.0
    %290 = vmatpush.msra.mxu0 0.0
    %291 = vmatpush.msra.mxu0 0.0
    %292 = vmatpush.msra.mxu0 0.0
    %293 = vmatpush.msra.mxu0 0.0
    %294 = vmatpush.msra.mxu0 0.0
    %295 = vmatpush.msra.mxu0 0.0
    %v296 = vand.u32 %v250, 4294901760
    %v297 = vsub.f32 %v250, %v296
    %v298 = vand.u32 %v297, 4294901760
    %v299 = vsub.f32 %v297, %v298
    %v300 = vand.u32 %v299, 4294901760
    %301 = vmatpush.msra.mxu0 %v300
    %v302 = vand.u32 %v249, 4294901760
    %v303 = vsub.f32 %v249, %v302
    %v304 = vand.u32 %v303, 4294901760
    %v305 = vsub.f32 %v303, %v304
    %v306 = vand.u32 %v305, 4294901760
    %307 = vmatpush.msra.mxu0 %v306
    %v308 = vand.u32 %v248, 4294901760
    %v309 = vsub.f32 %v248, %v308
    %v310 = vand.u32 %v309, 4294901760
    %v311 = vsub.f32 %v309, %v310
    %v312 = vand.u32 %v311, 4294901760
    %313 = vmatpush.msra.mxu0 %v312
    %v314 = vand.u32 %v247, 4294901760
    %v315 = vsub.f32 %v247, %v314
    %v316 = vand.u32 %v315, 4294901760
    %v317 = vsub.f32 %v315, %v316
    %v318 = vand.u32 %v317, 4294901760
    %319 = vmatpush.msra.mxu0 %v318
    %v320 = vand.u32 %v253, 4294901760
    %321 = vmatmul.f32.gmra.mxu0 %v320
    %v322 = vpop.f32.mrf.mxu0
    %v323 = vadd.f32 %v282, %v322
    %324 = vdwg.mxu0
    %325 = vmatpush.msra.mxu0 0.0
    %326 = vmatpush.msra.mxu0 0.0
    %327 = vmatpush.msra.mxu0 0.0
    %328 = vmatpush.msra.mxu0 0.0
    %329 = vmatpush.msra.mxu0 0.0
    %330 = vmatpush.msra.mxu0 0.0
    %331 = vmatpush.msra.mxu0 0.0
    %332 = vmatpush.msra.mxu0 0.0
    %333 = vmatpush.msra.mxu0 0.0
    %334 = vmatpush.msra.mxu0 0.0
    %335 = vmatpush.msra.mxu0 0.0
    %336 = vmatpush.msra.mxu0 0.0
    %v337 = vand.u32 %v250, 4294901760
    %v338 = vsub.f32 %v250, %v337
    %339 = vmatpush.msra.mxu0 %v338
    %v340 = vand.u32 %v249, 4294901760
    %v341 = vsub.f32 %v249, %v340
    %342 = vmatpush.msra.mxu0 %v341
    %v343 = vand.u32 %v248, 4294901760
    %v344 = vsub.f32 %v248, %v343
    %345 = vmatpush.msra.mxu0 %v344
    %v346 = vand.u32 %v247, 4294901760
    %v347 = vsub.f32 %v247, %v346
    %348 = vmatpush.msra.mxu0 %v347
    %v349 = vand.u32 %v253, 4294901760
    %v350 = vsub.f32 %v253, %v349
    %351 = vmatmul.f32.gmra.mxu0 %v350
    %v352 = vpop.f32.mrf.mxu0
    %v353 = vadd.f32 %v323, %v352
    %354 = vdwg.mxu0
    %355 = vmatpush.msra.mxu0 0.0
    %356 = vmatpush.msra.mxu0 0.0
    %357 = vmatpush.msra.mxu0 0.0
    %358 = vmatpush.msra.mxu0 0.0
    %359 = vmatpush.msra.mxu0 0.0
    %360 = vmatpush.msra.mxu0 0.0
    %361 = vmatpush.msra.mxu0 0.0
    %362 = vmatpush.msra.mxu0 0.0
    %363 = vmatpush.msra.mxu0 0.0
    %364 = vmatpush.msra.mxu0 0.0
    %365 = vmatpush.msra.mxu0 0.0
    %366 = vmatpush.msra.mxu0 0.0
    %v367 = vand.u32 %v250, 4294901760
    %368 = vmatpush.msra.mxu0 %v367
    %v369 = vand.u32 %v249, 4294901760
    %370 = vmatpush.msra.mxu0 %v369
    %v371 = vand.u32 %v248, 4294901760
    %372 = vmatpush.msra.mxu0 %v371
    %v373 = vand.u32 %v247, 4294901760
    %374 = vmatpush.msra.mxu0 %v373
    %v375 = vand.u32 %v253, 4294901760
    %v376 = vsub.f32 %v253, %v375
    %v377 = vand.u32 %v376, 4294901760
    %378 = vmatmul.f32.gmra.mxu0 %v377
    %v379 = vpop.f32.mrf.mxu0
    %v380 = vadd.f32 %v353, %v379
    %381 = vdwg.mxu0
    %382 = vmatpush.msra.mxu0 0.0
    %383 = vmatpush.msra.mxu0 0.0
    %384 = vmatpush.msra.mxu0 0.0
    %385 = vmatpush.msra.mxu0 0.0
    %386 = vmatpush.msra.mxu0 0.0
    %387 = vmatpush.msra.mxu0 0.0
    %388 = vmatpush.msra.mxu0 0.0
    %389 = vmatpush.msra.mxu0 0.0
    %390 = vmatpush.msra.mxu0 0.0
    %391 = vmatpush.msra.mxu0 0.0
    %392 = vmatpush.msra.mxu0 0.0
    %393 = vmatpush.msra.mxu0 0.0
    %v394 = vand.u32 %v250, 4294901760
    %v395 = vsub.f32 %v250, %v394
    %v396 = vand.u32 %v395, 4294901760
    %397 = vmatpush.msra.mxu0 %v396
    %v398 = vand.u32 %v249, 4294901760
    %v399 = vsub.f32 %v249, %v398
    %v400 = vand.u32 %v399, 4294901760
    %401 = vmatpush.msra.mxu0 %v400
    %v402 = vand.u32 %v248, 4294901760
    %v403 = vsub.f32 %v248, %v402
    %v404 = vand.u32 %v403, 4294901760
    %405 = vmatpush.msra.mxu0 %v404
    %v406 = vand.u32 %v247, 4294901760
    %v407 = vsub.f32 %v247, %v406
    %v408 = vand.u32 %v407, 4294901760
    %409 = vmatpush.msra.mxu0 %v408
    %v410 = vand.u32 %v253, 4294901760
    %411 = vmatmul.f32.gmra.mxu0 %v410
    %v412 = vpop.f32.mrf.mxu0
    %v413 = vadd.f32 %v380, %v412
    %414 = vdwg.mxu0
    %415 = vmatpush.msra.mxu0 0.0
    %416 = vmatpush.msra.mxu0 0.0
    %417 = vmatpush.msra.mxu0 0.0
    %418 = vmatpush.msra.mxu0 0.0
    %419 = vmatpush.msra.mxu0 0.0
    %420 = vmatpush.msra.mxu0 0.0
    %421 = vmatpush.msra.mxu0 0.0
    %422 = vmatpush.msra.mxu0 0.0
    %423 = vmatpush.msra.mxu0 0.0
    %424 = vmatpush.msra.mxu0 0.0
    %425 = vmatpush.msra.mxu0 0.0
    %426 = vmatpush.msra.mxu0 0.0
    %v427 = vand.u32 %v250, 4294901760
    %428 = vmatpush.msra.mxu0 %v427
    %v429 = vand.u32 %v249, 4294901760
    %430 = vmatpush.msra.mxu0 %v429
    %v431 = vand.u32 %v248, 4294901760
    %432 = vmatpush.msra.mxu0 %v431
    %v433 = vand.u32 %v247, 4294901760
    %434 = vmatpush.msra.mxu0 %v433
    %v435 = vand.u32 %v253, 4294901760
    %436 = vmatmul.f32.gmra.mxu0 %v435
    %v437 = vpop.f32.mrf.mxu0
    %v438 = vadd.f32 %v413, %v437
    %439 = vdwg.mxu0
    %v440 = vadd.f32 %v241, %v438
    %v441 = vtanh.pop %v440
    %v442 = vmul.f32 %v441, 0.5
    %v443 = vadd.f32 %v442, 0.5
    %v444 = vmul.f32 %v443, 0.0
    %446 = vrot.lane.b32.xlu0 %v441, 64
    %v447 = vpop.permute.xlu0 %446
    %v449 = vmul.f32 %v443, %v447
    %451 = vrot.lane.b32.xlu0 %v449, 32
    %v452 = vpop.permute.xlu0 %451
    %v454 = vadd.f32 %v444, %v452
    %v455 = vtanh.pop %v454
    %457 = vrot.lane.b32.xlu0 %v455, 64
    %v458 = vpop.permute.xlu0 %457
    %v460 = vmul.f32 %v443, %v458
    %462 = vrot.lane.b32.xlu0 %v460, 32
    %v463 = vpop.permute.xlu0 %462
    %v464 = vsel %vm251, %v463, 0
    %466 = vmatpush.msra.mxu0 0.0
    %467 = vmatpush.msra.mxu0 0.0
    %468 = vmatpush.msra.mxu0 0.0
    %469 = vmatpush.msra.mxu0 0.0
    %470 = vmatpush.msra.mxu0 0.0
    %471 = vmatpush.msra.mxu0 0.0
    %472 = vmatpush.msra.mxu0 0.0
    %473 = vmatpush.msra.mxu0 0.0
    %474 = vmatpush.msra.mxu0 0.0
    %475 = vmatpush.msra.mxu0 0.0
    %476 = vmatpush.msra.mxu0 0.0
    %477 = vmatpush.msra.mxu0 0.0
    %v478 = vand.u32 %v250, 4294901760
    %479 = vmatpush.msra.mxu0 %v478
    %v480 = vand.u32 %v249, 4294901760
    %481 = vmatpush.msra.mxu0 %v480
    %v482 = vand.u32 %v248, 4294901760
    %483 = vmatpush.msra.mxu0 %v482
    %v484 = vand.u32 %v247, 4294901760
    %485 = vmatpush.msra.mxu0 %v484
    %v486 = vand.u32 %v464, 4294901760
    %v487 = vsub.f32 %v464, %v486
    %v488 = vand.u32 %v487, 4294901760
    %v489 = vsub.f32 %v487, %v488
    %v490 = vand.u32 %v489, 4294901760
    %491 = vmatmul.f32.gmra.mxu0 %v490
    %v492 = vpop.f32.mrf.mxu0
    %v493 = vadd.f32 0.0, %v492
    %494 = vdwg.mxu0
    %495 = vmatpush.msra.mxu0 0.0
    %496 = vmatpush.msra.mxu0 0.0
    %497 = vmatpush.msra.mxu0 0.0
    %498 = vmatpush.msra.mxu0 0.0
    %499 = vmatpush.msra.mxu0 0.0
    %500 = vmatpush.msra.mxu0 0.0
    %501 = vmatpush.msra.mxu0 0.0
    %502 = vmatpush.msra.mxu0 0.0
    %503 = vmatpush.msra.mxu0 0.0
    %504 = vmatpush.msra.mxu0 0.0
    %505 = vmatpush.msra.mxu0 0.0
    %506 = vmatpush.msra.mxu0 0.0
    %v507 = vand.u32 %v250, 4294901760
    %v508 = vsub.f32 %v250, %v507
    %v509 = vand.u32 %v508, 4294901760
    %v510 = vsub.f32 %v508, %v509
    %v511 = vand.u32 %v510, 4294901760
    %512 = vmatpush.msra.mxu0 %v511
    %v513 = vand.u32 %v249, 4294901760
    %v514 = vsub.f32 %v249, %v513
    %v515 = vand.u32 %v514, 4294901760
    %v516 = vsub.f32 %v514, %v515
    %v517 = vand.u32 %v516, 4294901760
    %518 = vmatpush.msra.mxu0 %v517
    %v519 = vand.u32 %v248, 4294901760
    %v520 = vsub.f32 %v248, %v519
    %v521 = vand.u32 %v520, 4294901760
    %v522 = vsub.f32 %v520, %v521
    %v523 = vand.u32 %v522, 4294901760
    %524 = vmatpush.msra.mxu0 %v523
    %v525 = vand.u32 %v247, 4294901760
    %v526 = vsub.f32 %v247, %v525
    %v527 = vand.u32 %v526, 4294901760
    %v528 = vsub.f32 %v526, %v527
    %v529 = vand.u32 %v528, 4294901760
    %530 = vmatpush.msra.mxu0 %v529
    %v531 = vand.u32 %v464, 4294901760
    %532 = vmatmul.f32.gmra.mxu0 %v531
    %v533 = vpop.f32.mrf.mxu0
    %v534 = vadd.f32 %v493, %v533
    %535 = vdwg.mxu0
    %536 = vmatpush.msra.mxu0 0.0
    %537 = vmatpush.msra.mxu0 0.0
    %538 = vmatpush.msra.mxu0 0.0
    %539 = vmatpush.msra.mxu0 0.0
    %540 = vmatpush.msra.mxu0 0.0
    %541 = vmatpush.msra.mxu0 0.0
    %542 = vmatpush.msra.mxu0 0.0
    %543 = vmatpush.msra.mxu0 0.0
    %544 = vmatpush.msra.mxu0 0.0
    %545 = vmatpush.msra.mxu0 0.0
    %546 = vmatpush.msra.mxu0 0.0
    %547 = vmatpush.msra.mxu0 0.0
    %v548 = vand.u32 %v250, 4294901760
    %v549 = vsub.f32 %v250, %v548
    %550 = vmatpush.msra.mxu0 %v549
    %v551 = vand.u32 %v249, 4294901760
    %v552 = vsub.f32 %v249, %v551
    %553 = vmatpush.msra.mxu0 %v552
    %v554 = vand.u32 %v248, 4294901760
    %v555 = vsub.f32 %v248, %v554
    %556 = vmatpush.msra.mxu0 %v555
    %v557 = vand.u32 %v247, 4294901760
    %v558 = vsub.f32 %v247, %v557
    %559 = vmatpush.msra.mxu0 %v558
    %v560 = vand.u32 %v464, 4294901760
    %v561 = vsub.f32 %v464, %v560
    %562 = vmatmul.f32.gmra.mxu0 %v561
    %v563 = vpop.f32.mrf.mxu0
    %v564 = vadd.f32 %v534, %v563
    %565 = vdwg.mxu0
    %566 = vmatpush.msra.mxu0 0.0
    %567 = vmatpush.msra.mxu0 0.0
    %568 = vmatpush.msra.mxu0 0.0
    %569 = vmatpush.msra.mxu0 0.0
    %570 = vmatpush.msra.mxu0 0.0
    %571 = vmatpush.msra.mxu0 0.0
    %572 = vmatpush.msra.mxu0 0.0
    %573 = vmatpush.msra.mxu0 0.0
    %574 = vmatpush.msra.mxu0 0.0
    %575 = vmatpush.msra.mxu0 0.0
    %576 = vmatpush.msra.mxu0 0.0
    %577 = vmatpush.msra.mxu0 0.0
    %v578 = vand.u32 %v250, 4294901760
    %579 = vmatpush.msra.mxu0 %v578
    %v580 = vand.u32 %v249, 4294901760
    %581 = vmatpush.msra.mxu0 %v580
    %v582 = vand.u32 %v248, 4294901760
    %583 = vmatpush.msra.mxu0 %v582
    %v584 = vand.u32 %v247, 4294901760
    %585 = vmatpush.msra.mxu0 %v584
    %v586 = vand.u32 %v464, 4294901760
    %v587 = vsub.f32 %v464, %v586
    %v588 = vand.u32 %v587, 4294901760
    %589 = vmatmul.f32.gmra.mxu0 %v588
    %v590 = vpop.f32.mrf.mxu0
    %v591 = vadd.f32 %v564, %v590
    %592 = vdwg.mxu0
    %593 = vmatpush.msra.mxu0 0.0
    %594 = vmatpush.msra.mxu0 0.0
    %595 = vmatpush.msra.mxu0 0.0
    %596 = vmatpush.msra.mxu0 0.0
    %597 = vmatpush.msra.mxu0 0.0
    %598 = vmatpush.msra.mxu0 0.0
    %599 = vmatpush.msra.mxu0 0.0
    %600 = vmatpush.msra.mxu0 0.0
    %601 = vmatpush.msra.mxu0 0.0
    %602 = vmatpush.msra.mxu0 0.0
    %603 = vmatpush.msra.mxu0 0.0
    %604 = vmatpush.msra.mxu0 0.0
    %v605 = vand.u32 %v250, 4294901760
    %v606 = vsub.f32 %v250, %v605
    %v607 = vand.u32 %v606, 4294901760
    %608 = vmatpush.msra.mxu0 %v607
    %v609 = vand.u32 %v249, 4294901760
    %v610 = vsub.f32 %v249, %v609
    %v611 = vand.u32 %v610, 4294901760
    %612 = vmatpush.msra.mxu0 %v611
    %v613 = vand.u32 %v248, 4294901760
    %v614 = vsub.f32 %v248, %v613
    %v615 = vand.u32 %v614, 4294901760
    %616 = vmatpush.msra.mxu0 %v615
    %v617 = vand.u32 %v247, 4294901760
    %v618 = vsub.f32 %v247, %v617
    %v619 = vand.u32 %v618, 4294901760
    %620 = vmatpush.msra.mxu0 %v619
    %v621 = vand.u32 %v464, 4294901760
    %622 = vmatmul.f32.gmra.mxu0 %v621
    %v623 = vpop.f32.mrf.mxu0
    %v624 = vadd.f32 %v591, %v623
    %625 = vdwg.mxu0
    %626 = vmatpush.msra.mxu0 0.0
    %627 = vmatpush.msra.mxu0 0.0
    %628 = vmatpush.msra.mxu0 0.0
    %629 = vmatpush.msra.mxu0 0.0
    %630 = vmatpush.msra.mxu0 0.0
    %631 = vmatpush.msra.mxu0 0.0
    %632 = vmatpush.msra.mxu0 0.0
    %633 = vmatpush.msra.mxu0 0.0
    %634 = vmatpush.msra.mxu0 0.0
    %635 = vmatpush.msra.mxu0 0.0
    %636 = vmatpush.msra.mxu0 0.0
    %637 = vmatpush.msra.mxu0 0.0
    %v638 = vand.u32 %v250, 4294901760
    %639 = vmatpush.msra.mxu0 %v638
    %v640 = vand.u32 %v249, 4294901760
    %641 = vmatpush.msra.mxu0 %v640
    %v642 = vand.u32 %v248, 4294901760
    %643 = vmatpush.msra.mxu0 %v642
    %v644 = vand.u32 %v247, 4294901760
    %645 = vmatpush.msra.mxu0 %v644
    %v646 = vand.u32 %v464, 4294901760
    %647 = vmatmul.f32.gmra.mxu0 %v646
    %v648 = vpop.f32.mrf.mxu0
    %v649 = vadd.f32 %v624, %v648
    %650 = vdwg.mxu0
    %v652 = vrot.slane %v649, 6
    %v654 = vadd.f32 %v241, %v652
    %v655 = vtanh.pop %v654
    %v656 = vmul.f32 %v655, 0.5
    %v657 = vadd.f32 %v656, 0.5
    %v659 = vrot.slane %v454, 6
    %v661 = vmul.f32 %v657, %v659
    %663 = vrot.lane.b32.xlu0 %v655, 64
    %v664 = vpop.permute.xlu0 %663
    %v666 = vmul.f32 %v657, %v664
    %668 = vrot.lane.b32.xlu0 %v666, 32
    %v669 = vpop.permute.xlu0 %668
    %v671 = vadd.f32 %v661, %v669
    %v672 = vtanh.pop %v671
    %674 = vrot.lane.b32.xlu0 %v672, 64
    %v675 = vpop.permute.xlu0 %674
    %v677 = vmul.f32 %v657, %v675
    %v679 = vrot.slane %v677, 2
    %680 = vrot.lane.b32.xlu0 %v679, 32
    %v681 = vpop.permute.xlu0 %680
    %v682 = vsel %vm251, %v681, 0
    %684 = vmatpush.msra.mxu0 0.0
    %685 = vmatpush.msra.mxu0 0.0
    %686 = vmatpush.msra.mxu0 0.0
    %687 = vmatpush.msra.mxu0 0.0
    %688 = vmatpush.msra.mxu0 0.0
    %689 = vmatpush.msra.mxu0 0.0
    %690 = vmatpush.msra.mxu0 0.0
    %691 = vmatpush.msra.mxu0 0.0
    %692 = vmatpush.msra.mxu0 0.0
    %693 = vmatpush.msra.mxu0 0.0
    %694 = vmatpush.msra.mxu0 0.0
    %695 = vmatpush.msra.mxu0 0.0
    %v696 = vand.u32 %v250, 4294901760
    %697 = vmatpush.msra.mxu0 %v696
    %v698 = vand.u32 %v249, 4294901760
    %699 = vmatpush.msra.mxu0 %v698
    %v700 = vand.u32 %v248, 4294901760
    %701 = vmatpush.msra.mxu0 %v700
    %v702 = vand.u32 %v247, 4294901760
    %703 = vmatpush.msra.mxu0 %v702
    %v704 = vand.u32 %v682, 4294901760
    %v705 = vsub.f32 %v682, %v704
    %v706 = vand.u32 %v705, 4294901760
    %v707 = vsub.f32 %v705, %v706
    %v708 = vand.u32 %v707, 4294901760
    %709 = vmatmul.f32.gmra.mxu0 %v708
    %v710 = vpop.f32.mrf.mxu0
    %v711 = vadd.f32 0.0, %v710
    %712 = vdwg.mxu0
    %713 = vmatpush.msra.mxu0 0.0
    %714 = vmatpush.msra.mxu0 0.0
    %715 = vmatpush.msra.mxu0 0.0
    %716 = vmatpush.msra.mxu0 0.0
    %717 = vmatpush.msra.mxu0 0.0
    %718 = vmatpush.msra.mxu0 0.0
    %719 = vmatpush.msra.mxu0 0.0
    %720 = vmatpush.msra.mxu0 0.0
    %721 = vmatpush.msra.mxu0 0.0
    %722 = vmatpush.msra.mxu0 0.0
    %723 = vmatpush.msra.mxu0 0.0
    %724 = vmatpush.msra.mxu0 0.0
    %v725 = vand.u32 %v250, 4294901760
    %v726 = vsub.f32 %v250, %v725
    %v727 = vand.u32 %v726, 4294901760
    %v728 = vsub.f32 %v726, %v727
    %v729 = vand.u32 %v728, 4294901760
    %730 = vmatpush.msra.mxu0 %v729
    %v731 = vand.u32 %v249, 4294901760
    %v732 = vsub.f32 %v249, %v731
    %v733 = vand.u32 %v732, 4294901760
    %v734 = vsub.f32 %v732, %v733
    %v735 = vand.u32 %v734, 4294901760
    %736 = vmatpush.msra.mxu0 %v735
    %v737 = vand.u32 %v248, 4294901760
    %v738 = vsub.f32 %v248, %v737
    %v739 = vand.u32 %v738, 4294901760
    %v740 = vsub.f32 %v738, %v739
    %v741 = vand.u32 %v740, 4294901760
    %742 = vmatpush.msra.mxu0 %v741
    %v743 = vand.u32 %v247, 4294901760
    %v744 = vsub.f32 %v247, %v743
    %v745 = vand.u32 %v744, 4294901760
    %v746 = vsub.f32 %v744, %v745
    %v747 = vand.u32 %v746, 4294901760
    %748 = vmatpush.msra.mxu0 %v747
    %v749 = vand.u32 %v682, 4294901760
    %750 = vmatmul.f32.gmra.mxu0 %v749
    %v751 = vpop.f32.mrf.mxu0
    %v752 = vadd.f32 %v711, %v751
    %753 = vdwg.mxu0
    %754 = vmatpush.msra.mxu0 0.0
    %755 = vmatpush.msra.mxu0 0.0
    %756 = vmatpush.msra.mxu0 0.0
    %757 = vmatpush.msra.mxu0 0.0
    %758 = vmatpush.msra.mxu0 0.0
    %759 = vmatpush.msra.mxu0 0.0
    %760 = vmatpush.msra.mxu0 0.0
    %761 = vmatpush.msra.mxu0 0.0
    %762 = vmatpush.msra.mxu0 0.0
    %763 = vmatpush.msra.mxu0 0.0
    %764 = vmatpush.msra.mxu0 0.0
    %765 = vmatpush.msra.mxu0 0.0
    %v766 = vand.u32 %v250, 4294901760
    %v767 = vsub.f32 %v250, %v766
    %768 = vmatpush.msra.mxu0 %v767
    %v769 = vand.u32 %v249, 4294901760
    %v770 = vsub.f32 %v249, %v769
    %771 = vmatpush.msra.mxu0 %v770
    %v772 = vand.u32 %v248, 4294901760
    %v773 = vsub.f32 %v248, %v772
    %774 = vmatpush.msra.mxu0 %v773
    %v775 = vand.u32 %v247, 4294901760
    %v776 = vsub.f32 %v247, %v775
    %777 = vmatpush.msra.mxu0 %v776
    %v778 = vand.u32 %v682, 4294901760
    %v779 = vsub.f32 %v682, %v778
    %780 = vmatmul.f32.gmra.mxu0 %v779
    %v781 = vpop.f32.mrf.mxu0
    %v782 = vadd.f32 %v752, %v781
    %783 = vdwg.mxu0
    %784 = vmatpush.msra.mxu0 0.0
    %785 = vmatpush.msra.mxu0 0.0
    %786 = vmatpush.msra.mxu0 0.0
    %787 = vmatpush.msra.mxu0 0.0
    %788 = vmatpush.msra.mxu0 0.0
    %789 = vmatpush.msra.mxu0 0.0
    %790 = vmatpush.msra.mxu0 0.0
    %791 = vmatpush.msra.mxu0 0.0
    %792 = vmatpush.msra.mxu0 0.0
    %793 = vmatpush.msra.mxu0 0.0
    %794 = vmatpush.msra.mxu0 0.0
    %795 = vmatpush.msra.mxu0 0.0
    %v796 = vand.u32 %v250, 4294901760
    %797 = vmatpush.msra.mxu0 %v796
    %v798 = vand.u32 %v249, 4294901760
    %799 = vmatpush.msra.mxu0 %v798
    %v800 = vand.u32 %v248, 4294901760
    %801 = vmatpush.msra.mxu0 %v800
    %v802 = vand.u32 %v247, 4294901760
    %803 = vmatpush.msra.mxu0 %v802
    %v804 = vand.u32 %v682, 4294901760
    %v805 = vsub.f32 %v682, %v804
    %v806 = vand.u32 %v805, 4294901760
    %807 = vmatmul.f32.gmra.mxu0 %v806
    %v808 = vpop.f32.mrf.mxu0
    %v809 = vadd.f32 %v782, %v808
    %810 = vdwg.mxu0
    %811 = vmatpush.msra.mxu0 0.0
    %812 = vmatpush.msra.mxu0 0.0
    %813 = vmatpush.msra.mxu0 0.0
    %814 = vmatpush.msra.mxu0 0.0
    %815 = vmatpush.msra.mxu0 0.0
    %816 = vmatpush.msra.mxu0 0.0
    %817 = vmatpush.msra.mxu0 0.0
    %818 = vmatpush.msra.mxu0 0.0
    %819 = vmatpush.msra.mxu0 0.0
    %820 = vmatpush.msra.mxu0 0.0
    %821 = vmatpush.msra.mxu0 0.0
    %822 = vmatpush.msra.mxu0 0.0
    %v823 = vand.u32 %v250, 4294901760
    %v824 = vsub.f32 %v250, %v823
    %v825 = vand.u32 %v824, 4294901760
    %826 = vmatpush.msra.mxu0 %v825
    %v827 = vand.u32 %v249, 4294901760
    %v828 = vsub.f32 %v249, %v827
    %v829 = vand.u32 %v828, 4294901760
    %830 = vmatpush.msra.mxu0 %v829
    %v831 = vand.u32 %v248, 4294901760
    %v832 = vsub.f32 %v248, %v831
    %v833 = vand.u32 %v832, 4294901760
    %834 = vmatpush.msra.mxu0 %v833
    %v835 = vand.u32 %v247, 4294901760
    %v836 = vsub.f32 %v247, %v835
    %v837 = vand.u32 %v836, 4294901760
    %838 = vmatpush.msra.mxu0 %v837
    %v839 = vand.u32 %v682, 4294901760
    %840 = vmatmul.f32.gmra.mxu0 %v839
    %v841 = vpop.f32.mrf.mxu0
    %v842 = vadd.f32 %v809, %v841
    %843 = vdwg.mxu0
    %844 = vmatpush.msra.mxu0 0.0
    %845 = vmatpush.msra.mxu0 0.0
    %846 = vmatpush.msra.mxu0 0.0
    %847 = vmatpush.msra.mxu0 0.0
    %848 = vmatpush.msra.mxu0 0.0
    %849 = vmatpush.msra.mxu0 0.0
    %850 = vmatpush.msra.mxu0 0.0
    %851 = vmatpush.msra.mxu0 0.0
    %852 = vmatpush.msra.mxu0 0.0
    %853 = vmatpush.msra.mxu0 0.0
    %854 = vmatpush.msra.mxu0 0.0
    %855 = vmatpush.msra.mxu0 0.0
    %v856 = vand.u32 %v250, 4294901760
    %857 = vmatpush.msra.mxu0 %v856
    %v858 = vand.u32 %v249, 4294901760
    %859 = vmatpush.msra.mxu0 %v858
    %v860 = vand.u32 %v248, 4294901760
    %861 = vmatpush.msra.mxu0 %v860
    %v862 = vand.u32 %v247, 4294901760
    %863 = vmatpush.msra.mxu0 %v862
    %v864 = vand.u32 %v682, 4294901760
    %865 = vmatmul.f32.gmra.mxu0 %v864
    %v866 = vpop.f32.mrf.mxu0
    %v867 = vadd.f32 %v842, %v866
    %868 = vdwg.mxu0
    %v870 = vrot.slane %v867, 4
    %v872 = vadd.f32 %v241, %v870
    %v873 = vtanh.pop %v872
    %v874 = vmul.f32 %v873, 0.5
    %v875 = vadd.f32 %v874, 0.5
    %v877 = vrot.slane %v671, 6
    %v879 = vmul.f32 %v875, %v877
    %881 = vrot.lane.b32.xlu0 %v873, 64
    %v882 = vpop.permute.xlu0 %881
    %v884 = vmul.f32 %v875, %v882
    %886 = vrot.lane.b32.xlu0 %v884, 32
    %v887 = vpop.permute.xlu0 %886
    %v889 = vadd.f32 %v879, %v887
    %v890 = vtanh.pop %v889
    %892 = vrot.lane.b32.xlu0 %v890, 64
    %v893 = vpop.permute.xlu0 %892
    %v895 = vmul.f32 %v875, %v893
    %v897 = vrot.slane %v895, 4
    %898 = vrot.lane.b32.xlu0 %v897, 32
    %v899 = vpop.permute.xlu0 %898
    %v900 = vsel %vm251, %v899, 0
    %902 = vmatpush.msra.mxu0 0.0
    %903 = vmatpush.msra.mxu0 0.0
    %904 = vmatpush.msra.mxu0 0.0
    %905 = vmatpush.msra.mxu0 0.0
    %906 = vmatpush.msra.mxu0 0.0
    %907 = vmatpush.msra.mxu0 0.0
    %908 = vmatpush.msra.mxu0 0.0
    %909 = vmatpush.msra.mxu0 0.0
    %910 = vmatpush.msra.mxu0 0.0
    %911 = vmatpush.msra.mxu0 0.0
    %912 = vmatpush.msra.mxu0 0.0
    %913 = vmatpush.msra.mxu0 0.0
    %v914 = vand.u32 %v250, 4294901760
    %915 = vmatpush.msra.mxu0 %v914
    %v916 = vand.u32 %v249, 4294901760
    %917 = vmatpush.msra.mxu0 %v916
    %v918 = vand.u32 %v248, 4294901760
    %919 = vmatpush.msra.mxu0 %v918
    %v920 = vand.u32 %v247, 4294901760
    %921 = vmatpush.msra.mxu0 %v920
    %v922 = vand.u32 %v900, 4294901760
    %v923 = vsub.f32 %v900, %v922
    %v924 = vand.u32 %v923, 4294901760
    %v925 = vsub.f32 %v923, %v924
    %v926 = vand.u32 %v925, 4294901760
    %927 = vmatmul.f32.gmra.mxu0 %v926
    %v928 = vpop.f32.mrf.mxu0
    %v929 = vadd.f32 0.0, %v928
    %930 = vdwg.mxu0
    %931 = vmatpush.msra.mxu0 0.0
    %932 = vmatpush.msra.mxu0 0.0
    %933 = vmatpush.msra.mxu0 0.0
    %934 = vmatpush.msra.mxu0 0.0
    %935 = vmatpush.msra.mxu0 0.0
    %936 = vmatpush.msra.mxu0 0.0
    %937 = vmatpush.msra.mxu0 0.0
    %938 = vmatpush.msra.mxu0 0.0
    %939 = vmatpush.msra.mxu0 0.0
    %940 = vmatpush.msra.mxu0 0.0
    %941 = vmatpush.msra.mxu0 0.0
    %942 = vmatpush.msra.mxu0 0.0
    %v943 = vand.u32 %v250, 4294901760
    %v944 = vsub.f32 %v250, %v943
    %v945 = vand.u32 %v944, 4294901760
    %v946 = vsub.f32 %v944, %v945
    %v947 = vand.u32 %v946, 4294901760
    %948 = vmatpush.msra.mxu0 %v947
    %v949 = vand.u32 %v249, 4294901760
    %v950 = vsub.f32 %v249, %v949
    %v951 = vand.u32 %v950, 4294901760
    %v952 = vsub.f32 %v950, %v951
    %v953 = vand.u32 %v952, 4294901760
    %954 = vmatpush.msra.mxu0 %v953
    %v955 = vand.u32 %v248, 4294901760
    %v956 = vsub.f32 %v248, %v955
    %v957 = vand.u32 %v956, 4294901760
    %v958 = vsub.f32 %v956, %v957
    %v959 = vand.u32 %v958, 4294901760
    %960 = vmatpush.msra.mxu0 %v959
    %v961 = vand.u32 %v247, 4294901760
    %v962 = vsub.f32 %v247, %v961
    %v963 = vand.u32 %v962, 4294901760
    %v964 = vsub.f32 %v962, %v963
    %v965 = vand.u32 %v964, 4294901760
    %966 = vmatpush.msra.mxu0 %v965
    %v967 = vand.u32 %v900, 4294901760
    %968 = vmatmul.f32.gmra.mxu0 %v967
    %v969 = vpop.f32.mrf.mxu0
    %v970 = vadd.f32 %v929, %v969
    %971 = vdwg.mxu0
    %972 = vmatpush.msra.mxu0 0.0
    %973 = vmatpush.msra.mxu0 0.0
    %974 = vmatpush.msra.mxu0 0.0
    %975 = vmatpush.msra.mxu0 0.0
    %976 = vmatpush.msra.mxu0 0.0
    %977 = vmatpush.msra.mxu0 0.0
    %978 = vmatpush.msra.mxu0 0.0
    %979 = vmatpush.msra.mxu0 0.0
    %980 = vmatpush.msra.mxu0 0.0
    %981 = vmatpush.msra.mxu0 0.0
    %982 = vmatpush.msra.mxu0 0.0
    %983 = vmatpush.msra.mxu0 0.0
    %v984 = vand.u32 %v250, 4294901760
    %v985 = vsub.f32 %v250, %v984
    %986 = vmatpush.msra.mxu0 %v985
    %v987 = vand.u32 %v249, 4294901760
    %v988 = vsub.f32 %v249, %v987
    %989 = vmatpush.msra.mxu0 %v988
    %v990 = vand.u32 %v248, 4294901760
    %v991 = vsub.f32 %v248, %v990
    %992 = vmatpush.msra.mxu0 %v991
    %v993 = vand.u32 %v247, 4294901760
    %v994 = vsub.f32 %v247, %v993
    %995 = vmatpush.msra.mxu0 %v994
    %v996 = vand.u32 %v900, 4294901760
    %v997 = vsub.f32 %v900, %v996
    %998 = vmatmul.f32.gmra.mxu0 %v997
    %v999 = vpop.f32.mrf.mxu0
    %v1000 = vadd.f32 %v970, %v999
    %1001 = vdwg.mxu0
    %1002 = vmatpush.msra.mxu0 0.0
    %1003 = vmatpush.msra.mxu0 0.0
    %1004 = vmatpush.msra.mxu0 0.0
    %1005 = vmatpush.msra.mxu0 0.0
    %1006 = vmatpush.msra.mxu0 0.0
    %1007 = vmatpush.msra.mxu0 0.0
    %1008 = vmatpush.msra.mxu0 0.0
    %1009 = vmatpush.msra.mxu0 0.0
    %1010 = vmatpush.msra.mxu0 0.0
    %1011 = vmatpush.msra.mxu0 0.0
    %1012 = vmatpush.msra.mxu0 0.0
    %1013 = vmatpush.msra.mxu0 0.0
    %v1014 = vand.u32 %v250, 4294901760
    %1015 = vmatpush.msra.mxu0 %v1014
    %v1016 = vand.u32 %v249, 4294901760
    %1017 = vmatpush.msra.mxu0 %v1016
    %v1018 = vand.u32 %v248, 4294901760
    %1019 = vmatpush.msra.mxu0 %v1018
    %v1020 = vand.u32 %v247, 4294901760
    %1021 = vmatpush.msra.mxu0 %v1020
    %v1022 = vand.u32 %v900, 4294901760
    %v1023 = vsub.f32 %v900, %v1022
    %v1024 = vand.u32 %v1023, 4294901760
    %1025 = vmatmul.f32.gmra.mxu0 %v1024
    %v1026 = vpop.f32.mrf.mxu0
    %v1027 = vadd.f32 %v1000, %v1026
    %1028 = vdwg.mxu0
    %1029 = vmatpush.msra.mxu0 0.0
    %1030 = vmatpush.msra.mxu0 0.0
    %1031 = vmatpush.msra.mxu0 0.0
    %1032 = vmatpush.msra.mxu0 0.0
    %1033 = vmatpush.msra.mxu0 0.0
    %1034 = vmatpush.msra.mxu0 0.0
    %1035 = vmatpush.msra.mxu0 0.0
    %1036 = vmatpush.msra.mxu0 0.0
    %1037 = vmatpush.msra.mxu0 0.0
    %1038 = vmatpush.msra.mxu0 0.0
    %1039 = vmatpush.msra.mxu0 0.0
    %1040 = vmatpush.msra.mxu0 0.0
    %v1041 = vand.u32 %v250, 4294901760
    %v1042 = vsub.f32 %v250, %v1041
    %v1043 = vand.u32 %v1042, 4294901760
    %1044 = vmatpush.msra.mxu0 %v1043
    %v1045 = vand.u32 %v249, 4294901760
    %v1046 = vsub.f32 %v249, %v1045
    %v1047 = vand.u32 %v1046, 4294901760
    %1048 = vmatpush.msra.mxu0 %v1047
    %v1049 = vand.u32 %v248, 4294901760
    %v1050 = vsub.f32 %v248, %v1049
    %v1051 = vand.u32 %v1050, 4294901760
    %1052 = vmatpush.msra.mxu0 %v1051
    %v1053 = vand.u32 %v247, 4294901760
    %v1054 = vsub.f32 %v247, %v1053
    %v1055 = vand.u32 %v1054, 4294901760
    %1056 = vmatpush.msra.mxu0 %v1055
    %v1057 = vand.u32 %v900, 4294901760
    %1058 = vmatmul.f32.gmra.mxu0 %v1057
    %v1059 = vpop.f32.mrf.mxu0
    %v1060 = vadd.f32 %v1027, %v1059
    %1061 = vdwg.mxu0
    %1062 = vmatpush.msra.mxu0 0.0
    %1063 = vmatpush.msra.mxu0 0.0
    %1064 = vmatpush.msra.mxu0 0.0
    %1065 = vmatpush.msra.mxu0 0.0
    %1066 = vmatpush.msra.mxu0 0.0
    %1067 = vmatpush.msra.mxu0 0.0
    %1068 = vmatpush.msra.mxu0 0.0
    %1069 = vmatpush.msra.mxu0 0.0
    %1070 = vmatpush.msra.mxu0 0.0
    %1071 = vmatpush.msra.mxu0 0.0
    %1072 = vmatpush.msra.mxu0 0.0
    %1073 = vmatpush.msra.mxu0 0.0
    %v1074 = vand.u32 %v250, 4294901760
    %1075 = vmatpush.msra.mxu0 %v1074
    %v1076 = vand.u32 %v249, 4294901760
    %1077 = vmatpush.msra.mxu0 %v1076
    %v1078 = vand.u32 %v248, 4294901760
    %1079 = vmatpush.msra.mxu0 %v1078
    %v1080 = vand.u32 %v247, 4294901760
    %1081 = vmatpush.msra.mxu0 %v1080
    %v1082 = vand.u32 %v900, 4294901760
    %1083 = vmatmul.f32.gmra.mxu0 %v1082
    %v1084 = vpop.f32.mrf.mxu0
    %v1085 = vadd.f32 %v1060, %v1084
    %1086 = vdwg.mxu0
    %v1088 = vrot.slane %v1085, 2
    %v1090 = vadd.f32 %v241, %v1088
    %v1091 = vtanh.pop %v1090
    %v1092 = vmul.f32 %v1091, 0.5
    %v1093 = vadd.f32 %v1092, 0.5
    %v1095 = vrot.slane %v889, 6
    %v1097 = vmul.f32 %v1093, %v1095
    %1099 = vrot.lane.b32.xlu0 %v1091, 64
    %v1100 = vpop.permute.xlu0 %1099
    %v1102 = vmul.f32 %v1093, %v1100
    %1104 = vrot.lane.b32.xlu0 %v1102, 32
    %v1105 = vpop.permute.xlu0 %1104
    %v1107 = vadd.f32 %v1097, %v1105
    %v1108 = vtanh.pop %v1107
    %1110 = vrot.lane.b32.xlu0 %v1108, 64
    %v1111 = vpop.permute.xlu0 %1110
    %v1113 = vmul.f32 %v1093, %v1111
    %v1115 = vrot.slane %v1113, 6
    %1116 = vrot.lane.b32.xlu0 %v1115, 32
    %v1117 = vpop.permute.xlu0 %1116
    %v1118 = vsel %vm251, %v1117, 0
    %1120 = vmatpush.msra.mxu0 0.0
    %1121 = vmatpush.msra.mxu0 0.0
    %1122 = vmatpush.msra.mxu0 0.0
    %1123 = vmatpush.msra.mxu0 0.0
    %1124 = vmatpush.msra.mxu0 0.0
    %1125 = vmatpush.msra.mxu0 0.0
    %1126 = vmatpush.msra.mxu0 0.0
    %1127 = vmatpush.msra.mxu0 0.0
    %1128 = vmatpush.msra.mxu0 0.0
    %1129 = vmatpush.msra.mxu0 0.0
    %1130 = vmatpush.msra.mxu0 0.0
    %1131 = vmatpush.msra.mxu0 0.0
    %v1132 = vand.u32 %v250, 4294901760
    %1133 = vmatpush.msra.mxu0 %v1132
    %v1134 = vand.u32 %v249, 4294901760
    %1135 = vmatpush.msra.mxu0 %v1134
    %v1136 = vand.u32 %v248, 4294901760
    %1137 = vmatpush.msra.mxu0 %v1136
    %v1138 = vand.u32 %v247, 4294901760
    %1139 = vmatpush.msra.mxu0 %v1138
    %v1140 = vand.u32 %v1118, 4294901760
    %v1141 = vsub.f32 %v1118, %v1140
    %v1142 = vand.u32 %v1141, 4294901760
    %v1143 = vsub.f32 %v1141, %v1142
    %v1144 = vand.u32 %v1143, 4294901760
    %1145 = vmatmul.f32.gmra.mxu0 %v1144
    %v1146 = vpop.f32.mrf.mxu0
    %v1147 = vadd.f32 0.0, %v1146
    %1148 = vdwg.mxu0
    %1149 = vmatpush.msra.mxu0 0.0
    %1150 = vmatpush.msra.mxu0 0.0
    %1151 = vmatpush.msra.mxu0 0.0
    %1152 = vmatpush.msra.mxu0 0.0
    %1153 = vmatpush.msra.mxu0 0.0
    %1154 = vmatpush.msra.mxu0 0.0
    %1155 = vmatpush.msra.mxu0 0.0
    %1156 = vmatpush.msra.mxu0 0.0
    %1157 = vmatpush.msra.mxu0 0.0
    %1158 = vmatpush.msra.mxu0 0.0
    %1159 = vmatpush.msra.mxu0 0.0
    %1160 = vmatpush.msra.mxu0 0.0
    %v1161 = vand.u32 %v250, 4294901760
    %v1162 = vsub.f32 %v250, %v1161
    %v1163 = vand.u32 %v1162, 4294901760
    %v1164 = vsub.f32 %v1162, %v1163
    %v1165 = vand.u32 %v1164, 4294901760
    %1166 = vmatpush.msra.mxu0 %v1165
    %v1167 = vand.u32 %v249, 4294901760
    %v1168 = vsub.f32 %v249, %v1167
    %v1169 = vand.u32 %v1168, 4294901760
    %v1170 = vsub.f32 %v1168, %v1169
    %v1171 = vand.u32 %v1170, 4294901760
    %1172 = vmatpush.msra.mxu0 %v1171
    %v1173 = vand.u32 %v248, 4294901760
    %v1174 = vsub.f32 %v248, %v1173
    %v1175 = vand.u32 %v1174, 4294901760
    %v1176 = vsub.f32 %v1174, %v1175
    %v1177 = vand.u32 %v1176, 4294901760
    %1178 = vmatpush.msra.mxu0 %v1177
    %v1179 = vand.u32 %v247, 4294901760
    %v1180 = vsub.f32 %v247, %v1179
    %v1181 = vand.u32 %v1180, 4294901760
    %v1182 = vsub.f32 %v1180, %v1181
    %v1183 = vand.u32 %v1182, 4294901760
    %1184 = vmatpush.msra.mxu0 %v1183
    %v1185 = vand.u32 %v1118, 4294901760
    %1186 = vmatmul.f32.gmra.mxu0 %v1185
    %v1187 = vpop.f32.mrf.mxu0
    %v1188 = vadd.f32 %v1147, %v1187
    %1189 = vdwg.mxu0
    %1190 = vmatpush.msra.mxu0 0.0
    %1191 = vmatpush.msra.mxu0 0.0
    %1192 = vmatpush.msra.mxu0 0.0
    %1193 = vmatpush.msra.mxu0 0.0
    %1194 = vmatpush.msra.mxu0 0.0
    %1195 = vmatpush.msra.mxu0 0.0
    %1196 = vmatpush.msra.mxu0 0.0
    %1197 = vmatpush.msra.mxu0 0.0
    %1198 = vmatpush.msra.mxu0 0.0
    %1199 = vmatpush.msra.mxu0 0.0
    %1200 = vmatpush.msra.mxu0 0.0
    %1201 = vmatpush.msra.mxu0 0.0
    %v1202 = vand.u32 %v250, 4294901760
    %v1203 = vsub.f32 %v250, %v1202
    %1204 = vmatpush.msra.mxu0 %v1203
    %v1205 = vand.u32 %v249, 4294901760
    %v1206 = vsub.f32 %v249, %v1205
    %1207 = vmatpush.msra.mxu0 %v1206
    %v1208 = vand.u32 %v248, 4294901760
    %v1209 = vsub.f32 %v248, %v1208
    %1210 = vmatpush.msra.mxu0 %v1209
    %v1211 = vand.u32 %v247, 4294901760
    %v1212 = vsub.f32 %v247, %v1211
    %1213 = vmatpush.msra.mxu0 %v1212
    %v1214 = vand.u32 %v1118, 4294901760
    %v1215 = vsub.f32 %v1118, %v1214
    %1216 = vmatmul.f32.gmra.mxu0 %v1215
    %v1217 = vpop.f32.mrf.mxu0
    %v1218 = vadd.f32 %v1188, %v1217
    %1219 = vdwg.mxu0
    %1220 = vmatpush.msra.mxu0 0.0
    %1221 = vmatpush.msra.mxu0 0.0
    %1222 = vmatpush.msra.mxu0 0.0
    %1223 = vmatpush.msra.mxu0 0.0
    %1224 = vmatpush.msra.mxu0 0.0
    %1225 = vmatpush.msra.mxu0 0.0
    %1226 = vmatpush.msra.mxu0 0.0
    %1227 = vmatpush.msra.mxu0 0.0
    %1228 = vmatpush.msra.mxu0 0.0
    %1229 = vmatpush.msra.mxu0 0.0
    %1230 = vmatpush.msra.mxu0 0.0
    %1231 = vmatpush.msra.mxu0 0.0
    %v1232 = vand.u32 %v250, 4294901760
    %1233 = vmatpush.msra.mxu0 %v1232
    %v1234 = vand.u32 %v249, 4294901760
    %1235 = vmatpush.msra.mxu0 %v1234
    %v1236 = vand.u32 %v248, 4294901760
    %1237 = vmatpush.msra.mxu0 %v1236
    %v1238 = vand.u32 %v247, 4294901760
    %1239 = vmatpush.msra.mxu0 %v1238
    %v1240 = vand.u32 %v1118, 4294901760
    %v1241 = vsub.f32 %v1118, %v1240
    %v1242 = vand.u32 %v1241, 4294901760
    %1243 = vmatmul.f32.gmra.mxu0 %v1242
    %v1244 = vpop.f32.mrf.mxu0
    %v1245 = vadd.f32 %v1218, %v1244
    %1246 = vdwg.mxu0
    %1247 = vmatpush.msra.mxu0 0.0
    %1248 = vmatpush.msra.mxu0 0.0
    %1249 = vmatpush.msra.mxu0 0.0
    %1250 = vmatpush.msra.mxu0 0.0
    %1251 = vmatpush.msra.mxu0 0.0
    %1252 = vmatpush.msra.mxu0 0.0
    %1253 = vmatpush.msra.mxu0 0.0
    %1254 = vmatpush.msra.mxu0 0.0
    %1255 = vmatpush.msra.mxu0 0.0
    %1256 = vmatpush.msra.mxu0 0.0
    %1257 = vmatpush.msra.mxu0 0.0
    %1258 = vmatpush.msra.mxu0 0.0
    %v1259 = vand.u32 %v250, 4294901760
    %v1260 = vsub.f32 %v250, %v1259
    %v1261 = vand.u32 %v1260, 4294901760
    %1262 = vmatpush.msra.mxu0 %v1261
    %v1263 = vand.u32 %v249, 4294901760
    %v1264 = vsub.f32 %v249, %v1263
    %v1265 = vand.u32 %v1264, 4294901760
    %1266 = vmatpush.msra.mxu0 %v1265
    %v1267 = vand.u32 %v248, 4294901760
    %v1268 = vsub.f32 %v248, %v1267
    %v1269 = vand.u32 %v1268, 4294901760
    %1270 = vmatpush.msra.mxu0 %v1269
    %v1271 = vand.u32 %v247, 4294901760
    %v1272 = vsub.f32 %v247, %v1271
    %v1273 = vand.u32 %v1272, 4294901760
    %1274 = vmatpush.msra.mxu0 %v1273
    %v1275 = vand.u32 %v1118, 4294901760
    %1276 = vmatmul.f32.gmra.mxu0 %v1275
    %v1277 = vpop.f32.mrf.mxu0
    %v1278 = vadd.f32 %v1245, %v1277
    %1279 = vdwg.mxu0
    %1280 = vmatpush.msra.mxu0 0.0
    %1281 = vmatpush.msra.mxu0 0.0
    %1282 = vmatpush.msra.mxu0 0.0
    %1283 = vmatpush.msra.mxu0 0.0
    %1284 = vmatpush.msra.mxu0 0.0
    %1285 = vmatpush.msra.mxu0 0.0
    %1286 = vmatpush.msra.mxu0 0.0
    %1287 = vmatpush.msra.mxu0 0.0
    %1288 = vmatpush.msra.mxu0 0.0
    %1289 = vmatpush.msra.mxu0 0.0
    %1290 = vmatpush.msra.mxu0 0.0
    %1291 = vmatpush.msra.mxu0 0.0
    %v1292 = vand.u32 %v250, 4294901760
    %1293 = vmatpush.msra.mxu0 %v1292
    %v1294 = vand.u32 %v249, 4294901760
    %1295 = vmatpush.msra.mxu0 %v1294
    %v1296 = vand.u32 %v248, 4294901760
    %1297 = vmatpush.msra.mxu0 %v1296
    %v1298 = vand.u32 %v247, 4294901760
    %1299 = vmatpush.msra.mxu0 %v1298
    %v1300 = vand.u32 %v1118, 4294901760
    %1301 = vmatmul.f32.gmra.mxu0 %v1300
    %v1302 = vpop.f32.mrf.mxu0
    %v1303 = vadd.f32 %v1278, %v1302
    %1304 = vdwg.mxu0
    %v1305 = vadd.f32 %v242, %v1303
    %v1306 = vtanh.pop %v1305
    %v1307 = vmul.f32 %v1306, 0.5
    %v1308 = vadd.f32 %v1307, 0.5
    %v1310 = vrot.slane %v1107, 6
    %v1312 = vmul.f32 %v1308, %v1310
    %1314 = vrot.lane.b32.xlu0 %v1306, 64
    %v1315 = vpop.permute.xlu0 %1314
    %v1317 = vmul.f32 %v1308, %v1315
    %1319 = vrot.lane.b32.xlu0 %v1317, 32
    %v1320 = vpop.permute.xlu0 %1319
    %v1322 = vadd.f32 %v1312, %v1320
    %v1323 = vtanh.pop %v1322
    %1325 = vrot.lane.b32.xlu0 %v1323, 64
    %v1326 = vpop.permute.xlu0 %1325
    %v1328 = vmul.f32 %v1308, %v1326
    %1330 = vrot.lane.b32.xlu0 %v1328, 32
    %v1331 = vpop.permute.xlu0 %1330
    %v1332 = vsel %vm251, %v1331, 0
    %1334 = vmatpush.msra.mxu0 0.0
    %1335 = vmatpush.msra.mxu0 0.0
    %1336 = vmatpush.msra.mxu0 0.0
    %1337 = vmatpush.msra.mxu0 0.0
    %1338 = vmatpush.msra.mxu0 0.0
    %1339 = vmatpush.msra.mxu0 0.0
    %1340 = vmatpush.msra.mxu0 0.0
    %1341 = vmatpush.msra.mxu0 0.0
    %1342 = vmatpush.msra.mxu0 0.0
    %1343 = vmatpush.msra.mxu0 0.0
    %1344 = vmatpush.msra.mxu0 0.0
    %1345 = vmatpush.msra.mxu0 0.0
    %v1346 = vand.u32 %v250, 4294901760
    %1347 = vmatpush.msra.mxu0 %v1346
    %v1348 = vand.u32 %v249, 4294901760
    %1349 = vmatpush.msra.mxu0 %v1348
    %v1350 = vand.u32 %v248, 4294901760
    %1351 = vmatpush.msra.mxu0 %v1350
    %v1352 = vand.u32 %v247, 4294901760
    %1353 = vmatpush.msra.mxu0 %v1352
    %v1354 = vand.u32 %v1332, 4294901760
    %v1355 = vsub.f32 %v1332, %v1354
    %v1356 = vand.u32 %v1355, 4294901760
    %v1357 = vsub.f32 %v1355, %v1356
    %v1358 = vand.u32 %v1357, 4294901760
    %1359 = vmatmul.f32.gmra.mxu0 %v1358
    %v1360 = vpop.f32.mrf.mxu0
    %v1361 = vadd.f32 0.0, %v1360
    %1362 = vdwg.mxu0
    %1363 = vmatpush.msra.mxu0 0.0
    %1364 = vmatpush.msra.mxu0 0.0
    %1365 = vmatpush.msra.mxu0 0.0
    %1366 = vmatpush.msra.mxu0 0.0
    %1367 = vmatpush.msra.mxu0 0.0
    %1368 = vmatpush.msra.mxu0 0.0
    %1369 = vmatpush.msra.mxu0 0.0
    %1370 = vmatpush.msra.mxu0 0.0
    %1371 = vmatpush.msra.mxu0 0.0
    %1372 = vmatpush.msra.mxu0 0.0
    %1373 = vmatpush.msra.mxu0 0.0
    %1374 = vmatpush.msra.mxu0 0.0
    %v1375 = vand.u32 %v250, 4294901760
    %v1376 = vsub.f32 %v250, %v1375
    %v1377 = vand.u32 %v1376, 4294901760
    %v1378 = vsub.f32 %v1376, %v1377
    %v1379 = vand.u32 %v1378, 4294901760
    %1380 = vmatpush.msra.mxu0 %v1379
    %v1381 = vand.u32 %v249, 4294901760
    %v1382 = vsub.f32 %v249, %v1381
    %v1383 = vand.u32 %v1382, 4294901760
    %v1384 = vsub.f32 %v1382, %v1383
    %v1385 = vand.u32 %v1384, 4294901760
    %1386 = vmatpush.msra.mxu0 %v1385
    %v1387 = vand.u32 %v248, 4294901760
    %v1388 = vsub.f32 %v248, %v1387
    %v1389 = vand.u32 %v1388, 4294901760
    %v1390 = vsub.f32 %v1388, %v1389
    %v1391 = vand.u32 %v1390, 4294901760
    %1392 = vmatpush.msra.mxu0 %v1391
    %v1393 = vand.u32 %v247, 4294901760
    %v1394 = vsub.f32 %v247, %v1393
    %v1395 = vand.u32 %v1394, 4294901760
    %v1396 = vsub.f32 %v1394, %v1395
    %v1397 = vand.u32 %v1396, 4294901760
    %1398 = vmatpush.msra.mxu0 %v1397
    %v1399 = vand.u32 %v1332, 4294901760
    %1400 = vmatmul.f32.gmra.mxu0 %v1399
    %v1401 = vpop.f32.mrf.mxu0
    %v1402 = vadd.f32 %v1361, %v1401
    %1403 = vdwg.mxu0
    %1404 = vmatpush.msra.mxu0 0.0
    %1405 = vmatpush.msra.mxu0 0.0
    %1406 = vmatpush.msra.mxu0 0.0
    %1407 = vmatpush.msra.mxu0 0.0
    %1408 = vmatpush.msra.mxu0 0.0
    %1409 = vmatpush.msra.mxu0 0.0
    %1410 = vmatpush.msra.mxu0 0.0
    %1411 = vmatpush.msra.mxu0 0.0
    %1412 = vmatpush.msra.mxu0 0.0
    %1413 = vmatpush.msra.mxu0 0.0
    %1414 = vmatpush.msra.mxu0 0.0
    %1415 = vmatpush.msra.mxu0 0.0
    %v1416 = vand.u32 %v250, 4294901760
    %v1417 = vsub.f32 %v250, %v1416
    %1418 = vmatpush.msra.mxu0 %v1417
    %v1419 = vand.u32 %v249, 4294901760
    %v1420 = vsub.f32 %v249, %v1419
    %1421 = vmatpush.msra.mxu0 %v1420
    %v1422 = vand.u32 %v248, 4294901760
    %v1423 = vsub.f32 %v248, %v1422
    %1424 = vmatpush.msra.mxu0 %v1423
    %v1425 = vand.u32 %v247, 4294901760
    %v1426 = vsub.f32 %v247, %v1425
    %1427 = vmatpush.msra.mxu0 %v1426
    %v1428 = vand.u32 %v1332, 4294901760
    %v1429 = vsub.f32 %v1332, %v1428
    %1430 = vmatmul.f32.gmra.mxu0 %v1429
    %v1431 = vpop.f32.mrf.mxu0
    %v1432 = vadd.f32 %v1402, %v1431
    %1433 = vdwg.mxu0
    %1434 = vmatpush.msra.mxu0 0.0
    %1435 = vmatpush.msra.mxu0 0.0
    %1436 = vmatpush.msra.mxu0 0.0
    %1437 = vmatpush.msra.mxu0 0.0
    %1438 = vmatpush.msra.mxu0 0.0
    %1439 = vmatpush.msra.mxu0 0.0
    %1440 = vmatpush.msra.mxu0 0.0
    %1441 = vmatpush.msra.mxu0 0.0
    %1442 = vmatpush.msra.mxu0 0.0
    %1443 = vmatpush.msra.mxu0 0.0
    %1444 = vmatpush.msra.mxu0 0.0
    %1445 = vmatpush.msra.mxu0 0.0
    %v1446 = vand.u32 %v250, 4294901760
    %1447 = vmatpush.msra.mxu0 %v1446
    %v1448 = vand.u32 %v249, 4294901760
    %1449 = vmatpush.msra.mxu0 %v1448
    %v1450 = vand.u32 %v248, 4294901760
    %1451 = vmatpush.msra.mxu0 %v1450
    %v1452 = vand.u32 %v247, 4294901760
    %1453 = vmatpush.msra.mxu0 %v1452
    %v1454 = vand.u32 %v1332, 4294901760
    %v1455 = vsub.f32 %v1332, %v1454
    %v1456 = vand.u32 %v1455, 4294901760
    %1457 = vmatmul.f32.gmra.mxu0 %v1456
    %v1458 = vpop.f32.mrf.mxu0
    %v1459 = vadd.f32 %v1432, %v1458
    %1460 = vdwg.mxu0
    %1461 = vmatpush.msra.mxu0 0.0
    %1462 = vmatpush.msra.mxu0 0.0
    %1463 = vmatpush.msra.mxu0 0.0
    %1464 = vmatpush.msra.mxu0 0.0
    %1465 = vmatpush.msra.mxu0 0.0
    %1466 = vmatpush.msra.mxu0 0.0
    %1467 = vmatpush.msra.mxu0 0.0
    %1468 = vmatpush.msra.mxu0 0.0
    %1469 = vmatpush.msra.mxu0 0.0
    %1470 = vmatpush.msra.mxu0 0.0
    %1471 = vmatpush.msra.mxu0 0.0
    %1472 = vmatpush.msra.mxu0 0.0
    %v1473 = vand.u32 %v250, 4294901760
    %v1474 = vsub.f32 %v250, %v1473
    %v1475 = vand.u32 %v1474, 4294901760
    %1476 = vmatpush.msra.mxu0 %v1475
    %v1477 = vand.u32 %v249, 4294901760
    %v1478 = vsub.f32 %v249, %v1477
    %v1479 = vand.u32 %v1478, 4294901760
    %1480 = vmatpush.msra.mxu0 %v1479
    %v1481 = vand.u32 %v248, 4294901760
    %v1482 = vsub.f32 %v248, %v1481
    %v1483 = vand.u32 %v1482, 4294901760
    %1484 = vmatpush.msra.mxu0 %v1483
    %v1485 = vand.u32 %v247, 4294901760
    %v1486 = vsub.f32 %v247, %v1485
    %v1487 = vand.u32 %v1486, 4294901760
    %1488 = vmatpush.msra.mxu0 %v1487
    %v1489 = vand.u32 %v1332, 4294901760
    %1490 = vmatmul.f32.gmra.mxu0 %v1489
    %v1491 = vpop.f32.mrf.mxu0
    %v1492 = vadd.f32 %v1459, %v1491
    %1493 = vdwg.mxu0
    %1494 = vmatpush.msra.mxu0 0.0
    %1495 = vmatpush.msra.mxu0 0.0
    %1496 = vmatpush.msra.mxu0 0.0
    %1497 = vmatpush.msra.mxu0 0.0
    %1498 = vmatpush.msra.mxu0 0.0
    %1499 = vmatpush.msra.mxu0 0.0
    %1500 = vmatpush.msra.mxu0 0.0
    %1501 = vmatpush.msra.mxu0 0.0
    %1502 = vmatpush.msra.mxu0 0.0
    %1503 = vmatpush.msra.mxu0 0.0
    %1504 = vmatpush.msra.mxu0 0.0
    %1505 = vmatpush.msra.mxu0 0.0
    %v1506 = vand.u32 %v250, 4294901760
    %1507 = vmatpush.msra.mxu0 %v1506
    %v1508 = vand.u32 %v249, 4294901760
    %1509 = vmatpush.msra.mxu0 %v1508
    %v1510 = vand.u32 %v248, 4294901760
    %1511 = vmatpush.msra.mxu0 %v1510
    %v1512 = vand.u32 %v247, 4294901760
    %1513 = vmatpush.msra.mxu0 %v1512
    %v1514 = vand.u32 %v1332, 4294901760
    %1515 = vmatmul.f32.gmra.mxu0 %v1514
    %v1516 = vpop.f32.mrf.mxu0
    %v1517 = vadd.f32 %v1492, %v1516
    %1518 = vdwg.mxu0
    %v1520 = vrot.slane %v1517, 6
    %v1522 = vadd.f32 %v242, %v1520
    %v1523 = vtanh.pop %v1522
    %v1524 = vmul.f32 %v1523, 0.5
    %v1525 = vadd.f32 %v1524, 0.5
    %v1527 = vrot.slane %v1322, 6
    %v1529 = vmul.f32 %v1525, %v1527
    %1531 = vrot.lane.b32.xlu0 %v1523, 64
    %v1532 = vpop.permute.xlu0 %1531
    %v1534 = vmul.f32 %v1525, %v1532
    %1536 = vrot.lane.b32.xlu0 %v1534, 32
    %v1537 = vpop.permute.xlu0 %1536
    %v1539 = vadd.f32 %v1529, %v1537
    %v1540 = vtanh.pop %v1539
    %1542 = vrot.lane.b32.xlu0 %v1540, 64
    %v1543 = vpop.permute.xlu0 %1542
    %v1545 = vmul.f32 %v1525, %v1543
    %v1547 = vrot.slane %v1545, 2
    %1548 = vrot.lane.b32.xlu0 %v1547, 32
    %v1549 = vpop.permute.xlu0 %1548
    %v1550 = vsel %vm251, %v1549, 0
    %1552 = vmatpush.msra.mxu0 0.0
    %1553 = vmatpush.msra.mxu0 0.0
    %1554 = vmatpush.msra.mxu0 0.0
    %1555 = vmatpush.msra.mxu0 0.0
    %1556 = vmatpush.msra.mxu0 0.0
    %1557 = vmatpush.msra.mxu0 0.0
    %1558 = vmatpush.msra.mxu0 0.0
    %1559 = vmatpush.msra.mxu0 0.0
    %1560 = vmatpush.msra.mxu0 0.0
    %1561 = vmatpush.msra.mxu0 0.0
    %1562 = vmatpush.msra.mxu0 0.0
    %1563 = vmatpush.msra.mxu0 0.0
    %v1564 = vand.u32 %v250, 4294901760
    %1565 = vmatpush.msra.mxu0 %v1564
    %v1566 = vand.u32 %v249, 4294901760
    %1567 = vmatpush.msra.mxu0 %v1566
    %v1568 = vand.u32 %v248, 4294901760
    %1569 = vmatpush.msra.mxu0 %v1568
    %v1570 = vand.u32 %v247, 4294901760
    %1571 = vmatpush.msra.mxu0 %v1570
    %v1572 = vand.u32 %v1550, 4294901760
    %v1573 = vsub.f32 %v1550, %v1572
    %v1574 = vand.u32 %v1573, 4294901760
    %v1575 = vsub.f32 %v1573, %v1574
    %v1576 = vand.u32 %v1575, 4294901760
    %1577 = vmatmul.f32.gmra.mxu0 %v1576
    %v1578 = vpop.f32.mrf.mxu0
    %v1579 = vadd.f32 0.0, %v1578
    %1580 = vdwg.mxu0
    %1581 = vmatpush.msra.mxu0 0.0
    %1582 = vmatpush.msra.mxu0 0.0
    %1583 = vmatpush.msra.mxu0 0.0
    %1584 = vmatpush.msra.mxu0 0.0
    %1585 = vmatpush.msra.mxu0 0.0
    %1586 = vmatpush.msra.mxu0 0.0
    %1587 = vmatpush.msra.mxu0 0.0
    %1588 = vmatpush.msra.mxu0 0.0
    %1589 = vmatpush.msra.mxu0 0.0
    %1590 = vmatpush.msra.mxu0 0.0
    %1591 = vmatpush.msra.mxu0 0.0
    %1592 = vmatpush.msra.mxu0 0.0
    %v1593 = vand.u32 %v250, 4294901760
    %v1594 = vsub.f32 %v250, %v1593
    %v1595 = vand.u32 %v1594, 4294901760
    %v1596 = vsub.f32 %v1594, %v1595
    %v1597 = vand.u32 %v1596, 4294901760
    %1598 = vmatpush.msra.mxu0 %v1597
    %v1599 = vand.u32 %v249, 4294901760
    %v1600 = vsub.f32 %v249, %v1599
    %v1601 = vand.u32 %v1600, 4294901760
    %v1602 = vsub.f32 %v1600, %v1601
    %v1603 = vand.u32 %v1602, 4294901760
    %1604 = vmatpush.msra.mxu0 %v1603
    %v1605 = vand.u32 %v248, 4294901760
    %v1606 = vsub.f32 %v248, %v1605
    %v1607 = vand.u32 %v1606, 4294901760
    %v1608 = vsub.f32 %v1606, %v1607
    %v1609 = vand.u32 %v1608, 4294901760
    %1610 = vmatpush.msra.mxu0 %v1609
    %v1611 = vand.u32 %v247, 4294901760
    %v1612 = vsub.f32 %v247, %v1611
    %v1613 = vand.u32 %v1612, 4294901760
    %v1614 = vsub.f32 %v1612, %v1613
    %v1615 = vand.u32 %v1614, 4294901760
    %1616 = vmatpush.msra.mxu0 %v1615
    %v1617 = vand.u32 %v1550, 4294901760
    %1618 = vmatmul.f32.gmra.mxu0 %v1617
    %v1619 = vpop.f32.mrf.mxu0
    %v1620 = vadd.f32 %v1579, %v1619
    %1621 = vdwg.mxu0
    %1622 = vmatpush.msra.mxu0 0.0
    %1623 = vmatpush.msra.mxu0 0.0
    %1624 = vmatpush.msra.mxu0 0.0
    %1625 = vmatpush.msra.mxu0 0.0
    %1626 = vmatpush.msra.mxu0 0.0
    %1627 = vmatpush.msra.mxu0 0.0
    %1628 = vmatpush.msra.mxu0 0.0
    %1629 = vmatpush.msra.mxu0 0.0
    %1630 = vmatpush.msra.mxu0 0.0
    %1631 = vmatpush.msra.mxu0 0.0
    %1632 = vmatpush.msra.mxu0 0.0
    %1633 = vmatpush.msra.mxu0 0.0
    %v1634 = vand.u32 %v250, 4294901760
    %v1635 = vsub.f32 %v250, %v1634
    %1636 = vmatpush.msra.mxu0 %v1635
    %v1637 = vand.u32 %v249, 4294901760
    %v1638 = vsub.f32 %v249, %v1637
    %1639 = vmatpush.msra.mxu0 %v1638
    %v1640 = vand.u32 %v248, 4294901760
    %v1641 = vsub.f32 %v248, %v1640
    %1642 = vmatpush.msra.mxu0 %v1641
    %v1643 = vand.u32 %v247, 4294901760
    %v1644 = vsub.f32 %v247, %v1643
    %1645 = vmatpush.msra.mxu0 %v1644
    %v1646 = vand.u32 %v1550, 4294901760
    %v1647 = vsub.f32 %v1550, %v1646
    %1648 = vmatmul.f32.gmra.mxu0 %v1647
    %v1649 = vpop.f32.mrf.mxu0
    %v1650 = vadd.f32 %v1620, %v1649
    %1651 = vdwg.mxu0
    %1652 = vmatpush.msra.mxu0 0.0
    %1653 = vmatpush.msra.mxu0 0.0
    %1654 = vmatpush.msra.mxu0 0.0
    %1655 = vmatpush.msra.mxu0 0.0
    %1656 = vmatpush.msra.mxu0 0.0
    %1657 = vmatpush.msra.mxu0 0.0
    %1658 = vmatpush.msra.mxu0 0.0
    %1659 = vmatpush.msra.mxu0 0.0
    %1660 = vmatpush.msra.mxu0 0.0
    %1661 = vmatpush.msra.mxu0 0.0
    %1662 = vmatpush.msra.mxu0 0.0
    %1663 = vmatpush.msra.mxu0 0.0
    %v1664 = vand.u32 %v250, 4294901760
    %1665 = vmatpush.msra.mxu0 %v1664
    %v1666 = vand.u32 %v249, 4294901760
    %1667 = vmatpush.msra.mxu0 %v1666
    %v1668 = vand.u32 %v248, 4294901760
    %1669 = vmatpush.msra.mxu0 %v1668
    %v1670 = vand.u32 %v247, 4294901760
    %1671 = vmatpush.msra.mxu0 %v1670
    %v1672 = vand.u32 %v1550, 4294901760
    %v1673 = vsub.f32 %v1550, %v1672
    %v1674 = vand.u32 %v1673, 4294901760
    %1675 = vmatmul.f32.gmra.mxu0 %v1674
    %v1676 = vpop.f32.mrf.mxu0
    %v1677 = vadd.f32 %v1650, %v1676
    %1678 = vdwg.mxu0
    %1679 = vmatpush.msra.mxu0 0.0
    %1680 = vmatpush.msra.mxu0 0.0
    %1681 = vmatpush.msra.mxu0 0.0
    %1682 = vmatpush.msra.mxu0 0.0
    %1683 = vmatpush.msra.mxu0 0.0
    %1684 = vmatpush.msra.mxu0 0.0
    %1685 = vmatpush.msra.mxu0 0.0
    %1686 = vmatpush.msra.mxu0 0.0
    %1687 = vmatpush.msra.mxu0 0.0
    %1688 = vmatpush.msra.mxu0 0.0
    %1689 = vmatpush.msra.mxu0 0.0
    %1690 = vmatpush.msra.mxu0 0.0
    %v1691 = vand.u32 %v250, 4294901760
    %v1692 = vsub.f32 %v250, %v1691
    %v1693 = vand.u32 %v1692, 4294901760
    %1694 = vmatpush.msra.mxu0 %v1693
    %v1695 = vand.u32 %v249, 4294901760
    %v1696 = vsub.f32 %v249, %v1695
    %v1697 = vand.u32 %v1696, 4294901760
    %1698 = vmatpush.msra.mxu0 %v1697
    %v1699 = vand.u32 %v248, 4294901760
    %v1700 = vsub.f32 %v248, %v1699
    %v1701 = vand.u32 %v1700, 4294901760
    %1702 = vmatpush.msra.mxu0 %v1701
    %v1703 = vand.u32 %v247, 4294901760
    %v1704 = vsub.f32 %v247, %v1703
    %v1705 = vand.u32 %v1704, 4294901760
    %1706 = vmatpush.msra.mxu0 %v1705
    %v1707 = vand.u32 %v1550, 4294901760
    %1708 = vmatmul.f32.gmra.mxu0 %v1707
    %v1709 = vpop.f32.mrf.mxu0
    %v1710 = vadd.f32 %v1677, %v1709
    %1711 = vdwg.mxu0
    %1712 = vmatpush.msra.mxu0 0.0
    %1713 = vmatpush.msra.mxu0 0.0
    %1714 = vmatpush.msra.mxu0 0.0
    %1715 = vmatpush.msra.mxu0 0.0
    %1716 = vmatpush.msra.mxu0 0.0
    %1717 = vmatpush.msra.mxu0 0.0
    %1718 = vmatpush.msra.mxu0 0.0
    %1719 = vmatpush.msra.mxu0 0.0
    %1720 = vmatpush.msra.mxu0 0.0
    %1721 = vmatpush.msra.mxu0 0.0
    %1722 = vmatpush.msra.mxu0 0.0
    %1723 = vmatpush.msra.mxu0 0.0
    %v1724 = vand.u32 %v250, 4294901760
    %1725 = vmatpush.msra.mxu0 %v1724
    %v1726 = vand.u32 %v249, 4294901760
    %1727 = vmatpush.msra.mxu0 %v1726
    %v1728 = vand.u32 %v248, 4294901760
    %1729 = vmatpush.msra.mxu0 %v1728
    %v1730 = vand.u32 %v247, 4294901760
    %1731 = vmatpush.msra.mxu0 %v1730
    %v1732 = vand.u32 %v1550, 4294901760
    %1733 = vmatmul.f32.gmra.mxu0 %v1732
    %v1734 = vpop.f32.mrf.mxu0
    %v1735 = vadd.f32 %v1710, %v1734
    %1736 = vdwg.mxu0
    %v1738 = vrot.slane %v1735, 4
    %v1740 = vadd.f32 %v242, %v1738
    %v1741 = vtanh.pop %v1740
    %v1742 = vmul.f32 %v1741, 0.5
    %v1743 = vadd.f32 %v1742, 0.5
    %v1745 = vrot.slane %v1539, 6
    %v1747 = vmul.f32 %v1743, %v1745
    %1749 = vrot.lane.b32.xlu0 %v1741, 64
    %v1750 = vpop.permute.xlu0 %1749
    %v1752 = vmul.f32 %v1743, %v1750
    %1754 = vrot.lane.b32.xlu0 %v1752, 32
    %v1755 = vpop.permute.xlu0 %1754
    %v1757 = vadd.f32 %v1747, %v1755
    %v1758 = vtanh.pop %v1757
    %1760 = vrot.lane.b32.xlu0 %v1758, 64
    %v1761 = vpop.permute.xlu0 %1760
    %v1763 = vmul.f32 %v1743, %v1761
    %v1765 = vrot.slane %v1763, 4
    %1766 = vrot.lane.b32.xlu0 %v1765, 32
    %v1767 = vpop.permute.xlu0 %1766
    %v1768 = vsel %vm251, %v1767, 0
    %1770 = vmatpush.msra.mxu0 0.0
    %1771 = vmatpush.msra.mxu0 0.0
    %1772 = vmatpush.msra.mxu0 0.0
    %1773 = vmatpush.msra.mxu0 0.0
    %1774 = vmatpush.msra.mxu0 0.0
    %1775 = vmatpush.msra.mxu0 0.0
    %1776 = vmatpush.msra.mxu0 0.0
    %1777 = vmatpush.msra.mxu0 0.0
    %1778 = vmatpush.msra.mxu0 0.0
    %1779 = vmatpush.msra.mxu0 0.0
    %1780 = vmatpush.msra.mxu0 0.0
    %1781 = vmatpush.msra.mxu0 0.0
    %v1782 = vand.u32 %v250, 4294901760
    %1783 = vmatpush.msra.mxu0 %v1782
    %v1784 = vand.u32 %v249, 4294901760
    %1785 = vmatpush.msra.mxu0 %v1784
    %v1786 = vand.u32 %v248, 4294901760
    %1787 = vmatpush.msra.mxu0 %v1786
    %v1788 = vand.u32 %v247, 4294901760
    %1789 = vmatpush.msra.mxu0 %v1788
    %v1790 = vand.u32 %v1768, 4294901760
    %v1791 = vsub.f32 %v1768, %v1790
    %v1792 = vand.u32 %v1791, 4294901760
    %v1793 = vsub.f32 %v1791, %v1792
    %v1794 = vand.u32 %v1793, 4294901760
    %1795 = vmatmul.f32.gmra.mxu0 %v1794
    %v1796 = vpop.f32.mrf.mxu0
    %v1797 = vadd.f32 0.0, %v1796
    %1798 = vdwg.mxu0
    %1799 = vmatpush.msra.mxu0 0.0
    %1800 = vmatpush.msra.mxu0 0.0
    %1801 = vmatpush.msra.mxu0 0.0
    %1802 = vmatpush.msra.mxu0 0.0
    %1803 = vmatpush.msra.mxu0 0.0
    %1804 = vmatpush.msra.mxu0 0.0
    %1805 = vmatpush.msra.mxu0 0.0
    %1806 = vmatpush.msra.mxu0 0.0
    %1807 = vmatpush.msra.mxu0 0.0
    %1808 = vmatpush.msra.mxu0 0.0
    %1809 = vmatpush.msra.mxu0 0.0
    %1810 = vmatpush.msra.mxu0 0.0
    %v1811 = vand.u32 %v250, 4294901760
    %v1812 = vsub.f32 %v250, %v1811
    %v1813 = vand.u32 %v1812, 4294901760
    %v1814 = vsub.f32 %v1812, %v1813
    %v1815 = vand.u32 %v1814, 4294901760
    %1816 = vmatpush.msra.mxu0 %v1815
    %v1817 = vand.u32 %v249, 4294901760
    %v1818 = vsub.f32 %v249, %v1817
    %v1819 = vand.u32 %v1818, 4294901760
    %v1820 = vsub.f32 %v1818, %v1819
    %v1821 = vand.u32 %v1820, 4294901760
    %1822 = vmatpush.msra.mxu0 %v1821
    %v1823 = vand.u32 %v248, 4294901760
    %v1824 = vsub.f32 %v248, %v1823
    %v1825 = vand.u32 %v1824, 4294901760
    %v1826 = vsub.f32 %v1824, %v1825
    %v1827 = vand.u32 %v1826, 4294901760
    %1828 = vmatpush.msra.mxu0 %v1827
    %v1829 = vand.u32 %v247, 4294901760
    %v1830 = vsub.f32 %v247, %v1829
    %v1831 = vand.u32 %v1830, 4294901760
    %v1832 = vsub.f32 %v1830, %v1831
    %v1833 = vand.u32 %v1832, 4294901760
    %1834 = vmatpush.msra.mxu0 %v1833
    %v1835 = vand.u32 %v1768, 4294901760
    %1836 = vmatmul.f32.gmra.mxu0 %v1835
    %v1837 = vpop.f32.mrf.mxu0
    %v1838 = vadd.f32 %v1797, %v1837
    %1839 = vdwg.mxu0
    %1840 = vmatpush.msra.mxu0 0.0
    %1841 = vmatpush.msra.mxu0 0.0
    %1842 = vmatpush.msra.mxu0 0.0
    %1843 = vmatpush.msra.mxu0 0.0
    %1844 = vmatpush.msra.mxu0 0.0
    %1845 = vmatpush.msra.mxu0 0.0
    %1846 = vmatpush.msra.mxu0 0.0
    %1847 = vmatpush.msra.mxu0 0.0
    %1848 = vmatpush.msra.mxu0 0.0
    %1849 = vmatpush.msra.mxu0 0.0
    %1850 = vmatpush.msra.mxu0 0.0
    %1851 = vmatpush.msra.mxu0 0.0
    %v1852 = vand.u32 %v250, 4294901760
    %v1853 = vsub.f32 %v250, %v1852
    %1854 = vmatpush.msra.mxu0 %v1853
    %v1855 = vand.u32 %v249, 4294901760
    %v1856 = vsub.f32 %v249, %v1855
    %1857 = vmatpush.msra.mxu0 %v1856
    %v1858 = vand.u32 %v248, 4294901760
    %v1859 = vsub.f32 %v248, %v1858
    %1860 = vmatpush.msra.mxu0 %v1859
    %v1861 = vand.u32 %v247, 4294901760
    %v1862 = vsub.f32 %v247, %v1861
    %1863 = vmatpush.msra.mxu0 %v1862
    %v1864 = vand.u32 %v1768, 4294901760
    %v1865 = vsub.f32 %v1768, %v1864
    %1866 = vmatmul.f32.gmra.mxu0 %v1865
    %v1867 = vpop.f32.mrf.mxu0
    %v1868 = vadd.f32 %v1838, %v1867
    %1869 = vdwg.mxu0
    %1870 = vmatpush.msra.mxu0 0.0
    %1871 = vmatpush.msra.mxu0 0.0
    %1872 = vmatpush.msra.mxu0 0.0
    %1873 = vmatpush.msra.mxu0 0.0
    %1874 = vmatpush.msra.mxu0 0.0
    %1875 = vmatpush.msra.mxu0 0.0
    %1876 = vmatpush.msra.mxu0 0.0
    %1877 = vmatpush.msra.mxu0 0.0
    %1878 = vmatpush.msra.mxu0 0.0
    %1879 = vmatpush.msra.mxu0 0.0
    %1880 = vmatpush.msra.mxu0 0.0
    %1881 = vmatpush.msra.mxu0 0.0
    %v1882 = vand.u32 %v250, 4294901760
    %1883 = vmatpush.msra.mxu0 %v1882
    %v1884 = vand.u32 %v249, 4294901760
    %1885 = vmatpush.msra.mxu0 %v1884
    %v1886 = vand.u32 %v248, 4294901760
    %1887 = vmatpush.msra.mxu0 %v1886
    %v1888 = vand.u32 %v247, 4294901760
    %1889 = vmatpush.msra.mxu0 %v1888
    %v1890 = vand.u32 %v1768, 4294901760
    %v1891 = vsub.f32 %v1768, %v1890
    %v1892 = vand.u32 %v1891, 4294901760
    %1893 = vmatmul.f32.gmra.mxu0 %v1892
    %v1894 = vpop.f32.mrf.mxu0
    %v1895 = vadd.f32 %v1868, %v1894
    %1896 = vdwg.mxu0
    %1897 = vmatpush.msra.mxu0 0.0
    %1898 = vmatpush.msra.mxu0 0.0
    %1899 = vmatpush.msra.mxu0 0.0
    %1900 = vmatpush.msra.mxu0 0.0
    %1901 = vmatpush.msra.mxu0 0.0
    %1902 = vmatpush.msra.mxu0 0.0
    %1903 = vmatpush.msra.mxu0 0.0
    %1904 = vmatpush.msra.mxu0 0.0
    %1905 = vmatpush.msra.mxu0 0.0
    %1906 = vmatpush.msra.mxu0 0.0
    %1907 = vmatpush.msra.mxu0 0.0
    %1908 = vmatpush.msra.mxu0 0.0
    %v1909 = vand.u32 %v250, 4294901760
    %v1910 = vsub.f32 %v250, %v1909
    %v1911 = vand.u32 %v1910, 4294901760
    %1912 = vmatpush.msra.mxu0 %v1911
    %v1913 = vand.u32 %v249, 4294901760
    %v1914 = vsub.f32 %v249, %v1913
    %v1915 = vand.u32 %v1914, 4294901760
    %1916 = vmatpush.msra.mxu0 %v1915
    %v1917 = vand.u32 %v248, 4294901760
    %v1918 = vsub.f32 %v248, %v1917
    %v1919 = vand.u32 %v1918, 4294901760
    %1920 = vmatpush.msra.mxu0 %v1919
    %v1921 = vand.u32 %v247, 4294901760
    %v1922 = vsub.f32 %v247, %v1921
    %v1923 = vand.u32 %v1922, 4294901760
    %1924 = vmatpush.msra.mxu0 %v1923
    %v1925 = vand.u32 %v1768, 4294901760
    %1926 = vmatmul.f32.gmra.mxu0 %v1925
    %v1927 = vpop.f32.mrf.mxu0
    %v1928 = vadd.f32 %v1895, %v1927
    %1929 = vdwg.mxu0
    %1930 = vmatpush.msra.mxu0 0.0
    %1931 = vmatpush.msra.mxu0 0.0
    %1932 = vmatpush.msra.mxu0 0.0
    %1933 = vmatpush.msra.mxu0 0.0
    %1934 = vmatpush.msra.mxu0 0.0
    %1935 = vmatpush.msra.mxu0 0.0
    %1936 = vmatpush.msra.mxu0 0.0
    %1937 = vmatpush.msra.mxu0 0.0
    %1938 = vmatpush.msra.mxu0 0.0
    %1939 = vmatpush.msra.mxu0 0.0
    %1940 = vmatpush.msra.mxu0 0.0
    %1941 = vmatpush.msra.mxu0 0.0
    %v1942 = vand.u32 %v250, 4294901760
    %1943 = vmatpush.msra.mxu0 %v1942
    %v1944 = vand.u32 %v249, 4294901760
    %1945 = vmatpush.msra.mxu0 %v1944
    %v1946 = vand.u32 %v248, 4294901760
    %1947 = vmatpush.msra.mxu0 %v1946
    %v1948 = vand.u32 %v247, 4294901760
    %1949 = vmatpush.msra.mxu0 %v1948
    %v1950 = vand.u32 %v1768, 4294901760
    %1951 = vmatmul.f32.gmra.mxu0 %v1950
    %v1952 = vpop.f32.mrf.mxu0
    %v1953 = vadd.f32 %v1928, %v1952
    %1954 = vdwg.mxu0
    %v1956 = vrot.slane %v1953, 2
    %v1958 = vadd.f32 %v242, %v1956
    %v1959 = vtanh.pop %v1958
    %v1960 = vmul.f32 %v1959, 0.5
    %v1961 = vadd.f32 %v1960, 0.5
    %v1963 = vrot.slane %v1757, 6
    %v1965 = vmul.f32 %v1961, %v1963
    %1967 = vrot.lane.b32.xlu0 %v1959, 64
    %v1968 = vpop.permute.xlu0 %1967
    %v1970 = vmul.f32 %v1961, %v1968
    %1972 = vrot.lane.b32.xlu0 %v1970, 32
    %v1973 = vpop.permute.xlu0 %1972
    %v1975 = vadd.f32 %v1965, %v1973
    %v1976 = vtanh.pop %v1975
    %1978 = vrot.lane.b32.xlu0 %v1976, 64
    %v1979 = vpop.permute.xlu0 %1978
    %v1981 = vmul.f32 %v1961, %v1979
    %v1982 = vld [vmem:[%s4] sm:$0x1]
    %v1984 = vperm.slane %v1982, 0
    %1985 = vrot.lane.b32.xlu0 %v1984, 96
    %v1986 = vpop.permute.xlu0 %1985
    %v1988 = vmul.f32 %v1981, %v1986
    %1990 = vrot.lane.b32.xlu0 %v1988, 32
    %v1991 = vpop.permute.xlu0 %1990
    %vm1993 = vcmask 261126
    %v1994 = vsel %vm1993, %v1991, 0.0
    %1995 = vadd.xlane.f32.xlu0 %v1994
    %v1996 = vpop.xlane.xlu0 %1995
    %v1997 = vld [vmem:[#allocation2] sm:$0x1]
    %v1999 = vperm.slane %v1997, 0
    %v2001 = vadd.f32 %v1996, %v1999
    %vm2002 = vcmask 7174
    %2003 = vst.msk [vmem:[%s6 - $0x6] sm:$0xc0] %vm2002, %v2001
    // Predicated region
    $region30: #{tpu_custom_call.1} parent=1 // pred_check
      _
    $region31: #{tpu_custom_call.1} parent=1 // pred_check_branch
      %2005 = sbr.rel (0) target = $region33
    $region32: #{tpu_custom_call.1} parent=1 // pred_region
      _
    $region33: #{tpu_custom_call.1} parent=1 // pred_fallthru
      _
    // Predicated region
    $region34: #{tpu_custom_call.1} parent=1 // pred_check
      _
    $region35: #{tpu_custom_call.1} parent=1 // pred_check_branch
      %2007 = sbr.rel (0) target = $region37
    $region36: #{tpu_custom_call.1} parent=1 // pred_region
      _
    $region37: #{tpu_custom_call.1} parent=1 // pred_fallthru
      _
    %2008 = vsyncpa [#allocation4], 1

</llo_original>
